<compile_context>
chip_gen: v5e
topology: v5e:2x2
jax: 0.10.0
libtpu: 0.0.40
codegen_flags: <defaults>
</compile_context>

<pallas_src>
import functools

import jax
import jax.numpy as jnp
from jax import lax
from jax.experimental import pallas as pl
from jax.experimental.pallas import tpu as pltpu


def _up_conv_bn_hswish_kernel(x_ref, v_ref, shift_ref, o_ref):
    # x_ref:     (1, H+2, W+2, Cin)      zero-padded ORIGINAL-resolution input (one image)
    # v_ref:     (16, Cin, Cout)         parity-combined conv weights (BN scale folded in),
    #                                    index = ((p*2 + q)*2 + a)*2 + b
    # shift_ref: (1, Cout)               folded BN shift (f32)
    # o_ref:     (1, TT, 2, 2, W, Cout)  output row band, parity separated:
    #                                    o[0, t, p, q, l, :] = out[2*(j*TT+t)+p, 2*l+q, :]
    tt = o_ref.shape[1]
    wdim = o_ref.shape[4]
    cout = o_ref.shape[5]

    # Base (pre-upsample) row of this tile's halo window.
    row0 = pl.multiple_of(pl.program_id(1) * tt, tt)

    shift = shift_ref[0].astype(jnp.float32)  # (Cout,)

    # Parity decomposition of "3x3 conv on nearest-x2-upsampled input":
    #   out[2t+p, 2l+q, o] = sum_{a,b in {0,1}} sum_c
    #       x_pad[t+p+a, l+q+b, c] * V[p, q, a, b, c, o]
    for p in range(2):
        for q in range(2):
            acc = jnp.zeros((tt, wdim, cout), jnp.float32)
            for a in range(2):
                for b in range(2):
                    tap = x_ref[0, pl.ds(row0 + p + a, tt), q + b:q + b + wdim, :]
                    vidx = ((p * 2 + q) * 2 + a) * 2 + b
                    acc = acc + jnp.einsum(
                        "twc,co->two", tap, v_ref[vidx],
                        preferred_element_type=jnp.float32)
            # Folded BN (scale already in the weights) + HSwish, in f32.
            y = acc + shift
            y = y * jnp.clip(y + 3.0, 0.0, 6.0) * (1.0 / 6.0)
            o_ref[0, :, p, q] = y.astype(o_ref.dtype)


def _pick_row_tile(h, w, cin, cout, out_itemsize, in_itemsize):
    """Largest row tile (in pre-upsample rows) whose double-buffered, lane/sublane-padded
    VMEM footprint stays well inside every chip's scoped-VMEM default (16 MiB v5e /
    32 MiB v6e / 32-of-64 MiB v7x), preferring >= 2 row tiles per image so the output
    writeback of step i-1 overlaps compute of step i."""
    def rup(v, m):
        return -(-v // m) * m

    budget = 12 * 1024 * 1024
    # Padded original-resolution input image is resident once per image (its block index is
    # constant across the row axis, so it is DMA'd once), double buffered by the pipeline.
    in_bytes = 2 * (h + 2) * rup(w + 2, 8) * rup(cin, 128) * in_itemsize
    weight_bytes = 2 * 16 * rup(cin, 8) * rup(cout, 128) * in_itemsize

    def fits(tt):
        out_bytes = 2 * tt * 2 * 2 * rup(w, 8) * rup(cout, 128) * out_itemsize
        return in_bytes + weight_bytes + out_bytes <= budget

    divisors = [d for d in range(1, h + 1) if h % d == 0]
    fitting = [d for d in divisors if fits(d)] or [1]
    preferred = [d for d in fitting if h // d >= 2] or fitting
    return max(preferred)


@functools.partial(jax.jit, static_argnames=("compute_dtype", "row_tile"))
def up_module_forward(x_nchw, w_oihw, gamma, beta, running_mean, running_var,
                      eps=1e-5, *, compute_dtype=jnp.bfloat16, row_tile=None):
    """UpModule forward (eval mode). x_nchw: (N, Cin, H, W) -> (N, Cout, 2H, 2W)."""
    n, cin, h, w = x_nchw.shape
    cout = w_oihw.shape[0]

    # --- trace-time glue: BN folding, parity-combined weights, small input pad -----------
    scale = (gamma / jnp.sqrt(running_var + eps)).astype(jnp.float32)      # (Cout,)
    shift = (beta - running_mean * scale).astype(jnp.float32)              # (Cout,)

    w_hwio = jnp.transpose(w_oihw, (2, 3, 1, 0)).astype(jnp.float32)       # (3,3,Cin,Cout)
    w_folded = w_hwio * scale                                              # fold BN scale

    # groups[parity][tap offset a] -> which 3x3 kernel rows (cols) collapse onto original
    # row (col) t+parity+a after nearest-x2 upsampling.
    groups = (((0,), (1, 2)), ((0, 1), (2,)))
    v_blocks = []
    for p in range(2):
        for q in range(2):
            for a in range(2):
                for b in range(2):
                    blk = jnp.zeros((cin, cout), jnp.float32)
                    for kh in groups[p][a]:
                        for kw in groups[q][b]:
                            blk = blk + w_folded[kh, kw]
                    v_blocks.append(blk)
    v = jnp.stack(v_blocks, axis=0).astype(compute_dtype)                  # (16, Cin, Cout)

    # Original-resolution NHWC input, zero-padded by 1 pixel (tiny vs. the old 4x upsampled
    # + padded tensor), cast to the matmul operand dtype (bf16 by default).
    x_nhwc = jnp.transpose(x_nchw, (0, 2, 3, 1)).astype(compute_dtype)
    x_pad = jnp.pad(x_nhwc, ((0, 0), (1, 1), (1, 1), (0, 0)))              # (N, H+2, W+2, Cin)

    shift2 = shift.reshape(1, cout)

    tt = row_tile if row_tile is not None else _pick_row_tile(
        h, w, cin, cout,
        jnp.dtype(x_nchw.dtype).itemsize, jnp.dtype(compute_dtype).itemsize)
    if h % tt != 0:
        raise ValueError(f"row_tile {tt} must divide H={h}")

    # --- Pallas kernel: fused upsample + 3x3 conv + BN shift + HSwish, row-tiled ----------
    out_k = pl.pallas_call(
        _up_conv_bn_hswish_kernel,
        out_shape=jax.ShapeDtypeStruct((n, h, 2, 2, w, cout), x_nchw.dtype),
        grid_spec=pltpu.PrefetchScalarGridSpec(
            num_scalar_prefetch=0,
            grid=(n, h // tt),
            in_specs=[
                # Whole padded image per batch element; block index is constant in the row
                # axis, so it is DMA'd once per image and reused across row tiles.
                pl.BlockSpec((1, h + 2, w + 2, cin), lambda bi, ji: (bi, 0, 0, 0)),
                pl.BlockSpec((16, cin, cout), lambda bi, ji: (0, 0, 0)),
                pl.BlockSpec((1, cout), lambda bi, ji: (0, 0)),
            ],
            out_specs=pl.BlockSpec((1, tt, 2, 2, w, cout),
                                   lambda bi, ji: (bi, ji, 0, 0, 0, 0)),
        ),
        compiler_params=pltpu.CompilerParams(
            dimension_semantics=("parallel", "parallel")),
    )(x_pad, v, shift2)

    # Single output pass: parity de-interleave + NHWC->NCHW in one fused transpose/reshape.
    # (This transpose exists only because the module's external interface is NCHW; a model
    # kept NHWC end-to-end would drop it entirely.)
    out = jnp.transpose(out_k, (0, 5, 1, 2, 4, 3)).reshape(n, cout, 2 * h, 2 * w)
    return out


def _reference_forward(x_nchw, w_oihw, gamma, beta, running_mean, running_var, eps=1e-5):
    """Pure-JAX f32 reference of the PyTorch module (eval mode), no Pallas."""
    x = jnp.transpose(x_nchw, (0, 2, 3, 1)).astype(jnp.float32)
    x = jnp.repeat(jnp.repeat(x, 2, axis=1), 2, axis=2)                    # nearest x2
    w_hwio = jnp.transpose(w_oihw, (2, 3, 1, 0)).astype(jnp.float32)
    y = lax.conv_general_dilated(
        x, w_hwio, window_strides=(1, 1), padding=((1, 1), (1, 1)),
        dimension_numbers=("NHWC", "HWIO", "NHWC"))
    scale = gamma / jnp.sqrt(running_var + eps)
    shift = beta - running_mean * scale
    y = y * scale + shift
    y = y * jnp.clip(y + 3.0, 0.0, 6.0) / 6.0
    return jnp.transpose(y, (0, 3, 1, 2)).astype(x_nchw.dtype)


if __name__ == "__main__":
    # Small shapes consistent with the module: inchannel=4, outchannel=24.
    N, CIN, H, W = 2, 4, 16, 16
    COUT = 24

    key = jax.random.PRNGKey(0)
    kx, kw, kg, kb, km, kv = jax.random.split(key, 6)

    x = jax.random.normal(kx, (N, CIN, H, W), dtype=jnp.float32)
    w = jax.random.normal(kw, (COUT, CIN, 3, 3), dtype=jnp.float32) * 0.1
    gamma = 1.0 + 0.1 * jax.random.normal(kg, (COUT,), dtype=jnp.float32)
    beta = 0.1 * jax.random.normal(kb, (COUT,), dtype=jnp.float32)
    running_mean = 0.05 * jax.random.normal(km, (COUT,), dtype=jnp.float32)
    running_var = 1.0 + 0.1 * jax.random.uniform(kv, (COUT,), dtype=jnp.float32)

    ref = _reference_forward(x, w, gamma, beta, running_mean, running_var)

    # 1) f32-operand run: validates fused upsample, parity decomposition, BN folding,
    #    row tiling and the output de-interleave exactly against the reference.
    out_f32 = jax.block_until_ready(
        up_module_forward(x, w, gamma, beta, running_mean, running_var,
                          compute_dtype=jnp.float32))
    assert out_f32.shape == (N, COUT, 2 * H, 2 * W), out_f32.shape
    assert jnp.allclose(out_f32, ref, atol=1e-4, rtol=1e-4), "f32 path mismatch vs reference"

    # 2) Performance configuration: bf16 matmul operands, f32 accumulation/epilogue.
    out = jax.block_until_ready(
        up_module_forward(x, w, gamma, beta, running_mean, running_var))
    assert out.shape == (N, COUT, 2 * H, 2 * W), out.shape
    assert jnp.allclose(out, ref, atol=2e-1, rtol=5e-2), "bf16 path mismatch vs reference"

    print("KERNEL_OK")
</pallas_src>

<mosaic_0001>
module attributes {stable_mosaic.version = 11 : i64} {
  func.func @_up_conv_bn_hswish_kernel(%arg0: i32, %arg1: i32, %arg2: memref<1x18x18x4xf32, #tpu.memory_space<vmem>>, %arg3: memref<16x4x24xf32, #tpu.memory_space<vmem>>, %arg4: memref<1x24xf32, #tpu.memory_space<vmem>>, %arg5: memref<1x8x2x2x16x24xf32, #tpu.memory_space<vmem>>) attributes {dimension_semantics = [#tpu.dimension_semantics<parallel>, #tpu.dimension_semantics<parallel>], iteration_bounds = array<i64: 2, 2>, scalar_prefetch = 0 : i64, scratch_operands = 0 : i64, tpu.core_type = #tpu.core_type<tc>, window_params = [{transform_indices = @transform_0, window_bounds = array<i64: 1, 18, 18, 4>}, {pipeline_mode = #tpu.pipeline_mode<synchronous>, transform_indices = @transform_1, window_bounds = array<i64: 16, 4, 24>}, {pipeline_mode = #tpu.pipeline_mode<synchronous>, transform_indices = @transform_2, window_bounds = array<i64: 1, 24>}, {transform_indices = @transform_3, window_bounds = array<i64: 1, 8, 2, 2, 16, 24>}]} {
    %c8_i32 = arith.constant 8 : i32
    %0 = arith.muli %arg1, %c8_i32 : i32
    %1 = tpu.assume_multiple %0, 8 : i32
    %c0 = arith.constant 0 : index
    %c0_0 = arith.constant 0 : index
    %2 = vector.load %arg4[%c0, %c0_0] : memref<1x24xf32, #tpu.memory_space<vmem>>, vector<1x24xf32>
    %3 = vector.shape_cast %2 : vector<1x24xf32> to vector<24xf32>
    %cst = arith.constant 0.000000e+00 : f32
    %4 = vector.broadcast %cst : f32 to vector<8x16x24xf32>
    %c0_i32 = arith.constant 0 : i32
    %5 = arith.addi %1, %c0_i32 : i32
    %c0_i32_1 = arith.constant 0 : i32
    %6 = arith.addi %5, %c0_i32_1 : i32
    %c0_2 = arith.constant 0 : index
    %7 = arith.index_cast %6 : i32 to index
    %c0_3 = arith.constant 0 : index
    %c0_4 = arith.constant 0 : index
    %8 = vector.load %arg2[%c0_2, %7, %c0_3, %c0_4] : memref<1x18x18x4xf32, #tpu.memory_space<vmem>>, vector<1x8x16x4xf32>
    %9 = vector.shape_cast %8 : vector<1x8x16x4xf32> to vector<8x16x4xf32>
    %c0_5 = arith.constant 0 : index
    %c0_6 = arith.constant 0 : index
    %c0_7 = arith.constant 0 : index
    %10 = vector.load %arg3[%c0_5, %c0_6, %c0_7] : memref<16x4x24xf32, #tpu.memory_space<vmem>>, vector<1x4x24xf32>
    %11 = vector.shape_cast %10 : vector<1x4x24xf32> to vector<4x24xf32>
    "tpu.trace_start"() <{level = 10 : i32, message = "twc,co->two"}> : () -> ()
    %cst_8 = arith.constant dense<0.000000e+00> : vector<8x16x24xf32>
    %12 = tpu.matmul %9, %11, %cst_8 {dimension_numbers = #tpu.dot_dimension_numbers<[2], [0], [0, 1], [1], [0, 0, 0, 1, 1, 1], [], []>} : vector<8x16x4xf32>, vector<4x24xf32>, vector<8x16x24xf32> -> vector<8x16x24xf32>
    "tpu.trace_stop"() : () -> ()
    %13 = arith.addf %4, %12 : vector<8x16x24xf32>
    %c0_i32_9 = arith.constant 0 : i32
    %14 = arith.addi %1, %c0_i32_9 : i32
    %c0_i32_10 = arith.constant 0 : i32
    %15 = arith.addi %14, %c0_i32_10 : i32
    %c0_11 = arith.constant 0 : index
    %16 = arith.index_cast %15 : i32 to index
    %c1 = arith.constant 1 : index
    %c0_12 = arith.constant 0 : index
    %17 = vector.load %arg2[%c0_11, %16, %c1, %c0_12] : memref<1x18x18x4xf32, #tpu.memory_space<vmem>>, vector<1x8x16x4xf32>
    %18 = vector.shape_cast %17 : vector<1x8x16x4xf32> to vector<8x16x4xf32>
    %c1_13 = arith.constant 1 : index
    %c0_14 = arith.constant 0 : index
    %c0_15 = arith.constant 0 : index
    %19 = vector.load %arg3[%c1_13, %c0_14, %c0_15] : memref<16x4x24xf32, #tpu.memory_space<vmem>>, vector<1x4x24xf32>
    %20 = vector.shape_cast %19 : vector<1x4x24xf32> to vector<4x24xf32>
    "tpu.trace_start"() <{level = 10 : i32, message = "twc,co->two"}> : () -> ()
    %cst_16 = arith.constant dense<0.000000e+00> : vector<8x16x24xf32>
    %21 = tpu.matmul %18, %20, %cst_16 {dimension_numbers = #tpu.dot_dimension_numbers<[2], [0], [0, 1], [1], [0, 0, 0, 1, 1, 1], [], []>} : vector<8x16x4xf32>, vector<4x24xf32>, vector<8x16x24xf32> -> vector<8x16x24xf32>
    "tpu.trace_stop"() : () -> ()
    %22 = arith.addf %13, %21 : vector<8x16x24xf32>
    %c0_i32_17 = arith.constant 0 : i32
    %23 = arith.addi %1, %c0_i32_17 : i32
    %c1_i32 = arith.constant 1 : i32
    %24 = arith.addi %23, %c1_i32 : i32
    %c0_18 = arith.constant 0 : index
    %25 = arith.index_cast %24 : i32 to index
    %c0_19 = arith.constant 0 : index
    %c0_20 = arith.constant 0 : index
    %26 = vector.load %arg2[%c0_18, %25, %c0_19, %c0_20] : memref<1x18x18x4xf32, #tpu.memory_space<vmem>>, vector<1x8x16x4xf32>
    %27 = vector.shape_cast %26 : vector<1x8x16x4xf32> to vector<8x16x4xf32>
    %c2 = arith.constant 2 : index
    %c0_21 = arith.constant 0 : index
    %c0_22 = arith.constant 0 : index
    %28 = vector.load %arg3[%c2, %c0_21, %c0_22] : memref<16x4x24xf32, #tpu.memory_space<vmem>>, vector<1x4x24xf32>
    %29 = vector.shape_cast %28 : vector<1x4x24xf32> to vector<4x24xf32>
    "tpu.trace_start"() <{level = 10 : i32, message = "twc,co->two"}> : () -> ()
    %cst_23 = arith.constant dense<0.000000e+00> : vector<8x16x24xf32>
    %30 = tpu.matmul %27, %29, %cst_23 {dimension_numbers = #tpu.dot_dimension_numbers<[2], [0], [0, 1], [1], [0, 0, 0, 1, 1, 1], [], []>} : vector<8x16x4xf32>, vector<4x24xf32>, vector<8x16x24xf32> -> vector<8x16x24xf32>
    "tpu.trace_stop"() : () -> ()
    %31 = arith.addf %22, %30 : vector<8x16x24xf32>
    %c0_i32_24 = arith.constant 0 : i32
    %32 = arith.addi %1, %c0_i32_24 : i32
    %c1_i32_25 = arith.constant 1 : i32
    %33 = arith.addi %32, %c1_i32_25 : i32
    %c0_26 = arith.constant 0 : index
    %34 = arith.index_cast %33 : i32 to index
    %c1_27 = arith.constant 1 : index
    %c0_28 = arith.constant 0 : index
    %35 = vector.load %arg2[%c0_26, %34, %c1_27, %c0_28] : memref<1x18x18x4xf32, #tpu.memory_space<vmem>>, vector<1x8x16x4xf32>
    %36 = vector.shape_cast %35 : vector<1x8x16x4xf32> to vector<8x16x4xf32>
    %c3 = arith.constant 3 : index
    %c0_29 = arith.constant 0 : index
    %c0_30 = arith.constant 0 : index
    %37 = vector.load %arg3[%c3, %c0_29, %c0_30] : memref<16x4x24xf32, #tpu.memory_space<vmem>>, vector<1x4x24xf32>
    %38 = vector.shape_cast %37 : vector<1x4x24xf32> to vector<4x24xf32>
    "tpu.trace_start"() <{level = 10 : i32, message = "twc,co->two"}> : () -> ()
    %cst_31 = arith.constant dense<0.000000e+00> : vector<8x16x24xf32>
    %39 = tpu.matmul %36, %38, %cst_31 {dimension_numbers = #tpu.dot_dimension_numbers<[2], [0], [0, 1], [1], [0, 0, 0, 1, 1, 1], [], []>} : vector<8x16x4xf32>, vector<4x24xf32>, vector<8x16x24xf32> -> vector<8x16x24xf32>
    "tpu.trace_stop"() : () -> ()
    %40 = arith.addf %31, %39 : vector<8x16x24xf32>
    %41 = vector.shape_cast %3 : vector<24xf32> to vector<1x1x24xf32>
    %42 = vector.broadcast %41 : vector<1x1x24xf32> to vector<8x16x24xf32>
    %43 = arith.addf %40, %42 : vector<8x16x24xf32>
    %cst_32 = arith.constant 3.000000e+00 : f32
    %44 = vector.broadcast %cst_32 : f32 to vector<8x16x24xf32>
    %45 = arith.addf %43, %44 : vector<8x16x24xf32>
    %cst_33 = arith.constant 0.000000e+00 : f32
    %cst_34 = arith.constant 6.000000e+00 : f32
    %46 = vector.broadcast %cst_33 : f32 to vector<8x16x24xf32>
    %47 = arith.maximumf %46, %45 : vector<8x16x24xf32>
    %48 = vector.broadcast %cst_34 : f32 to vector<8x16x24xf32>
    %49 = arith.minimumf %48, %47 : vector<8x16x24xf32>
    %50 = arith.mulf %43, %49 : vector<8x16x24xf32>
    %cst_35 = arith.constant 0.166666672 : f32
    %51 = vector.broadcast %cst_35 : f32 to vector<8x16x24xf32>
    %52 = arith.mulf %50, %51 : vector<8x16x24xf32>
    %c0_36 = arith.constant 0 : index
    %c0_37 = arith.constant 0 : index
    %c0_38 = arith.constant 0 : index
    %c0_39 = arith.constant 0 : index
    %c0_40 = arith.constant 0 : index
    %c0_41 = arith.constant 0 : index
    %53 = vector.load %arg5[%c0_36, %c0_37, %c0_38, %c0_39, %c0_40, %c0_41] : memref<1x8x2x2x16x24xf32, #tpu.memory_space<vmem>>, vector<1x8x1x1x16x24xf32>
    %54 = vector.shape_cast %53 : vector<1x8x1x1x16x24xf32> to vector<8x16x24xf32>
    %55 = vector.shape_cast %52 : vector<8x16x24xf32> to vector<1x8x1x1x16x24xf32>
    tpu.vector_store %arg5[%c0_36, %c0_37, %c0_38, %c0_39, %c0_40, %c0_41], %55 {strides = array<i32>} : memref<1x8x2x2x16x24xf32, #tpu.memory_space<vmem>>, vector<1x8x1x1x16x24xf32>,
    %cst_42 = arith.constant 0.000000e+00 : f32
    %56 = vector.broadcast %cst_42 : f32 to vector<8x16x24xf32>
    %c0_i32_43 = arith.constant 0 : i32
    %57 = arith.addi %1, %c0_i32_43 : i32
    %c0_i32_44 = arith.constant 0 : i32
    %58 = arith.addi %57, %c0_i32_44 : i32
    %c0_45 = arith.constant 0 : index
    %59 = arith.index_cast %58 : i32 to index
    %c1_46 = arith.constant 1 : index
    %c0_47 = arith.constant 0 : index
    %60 = vector.load %arg2[%c0_45, %59, %c1_46, %c0_47] : memref<1x18x18x4xf32, #tpu.memory_space<vmem>>, vector<1x8x16x4xf32>
    %61 = vector.shape_cast %60 : vector<1x8x16x4xf32> to vector<8x16x4xf32>
    %c4 = arith.constant 4 : index
    %c0_48 = arith.constant 0 : index
    %c0_49 = arith.constant 0 : index
    %62 = vector.load %arg3[%c4, %c0_48, %c0_49] : memref<16x4x24xf32, #tpu.memory_space<vmem>>, vector<1x4x24xf32>
    %63 = vector.shape_cast %62 : vector<1x4x24xf32> to vector<4x24xf32>
    "tpu.trace_start"() <{level = 10 : i32, message = "twc,co->two"}> : () -> ()
    %cst_50 = arith.constant dense<0.000000e+00> : vector<8x16x24xf32>
    %64 = tpu.matmul %61, %63, %cst_50 {dimension_numbers = #tpu.dot_dimension_numbers<[2], [0], [0, 1], [1], [0, 0, 0, 1, 1, 1], [], []>} : vector<8x16x4xf32>, vector<4x24xf32>, vector<8x16x24xf32> -> vector<8x16x24xf32>
    "tpu.trace_stop"() : () -> ()
    %65 = arith.addf %56, %64 : vector<8x16x24xf32>
    %c0_i32_51 = arith.constant 0 : i32
    %66 = arith.addi %1, %c0_i32_51 : i32
    %c0_i32_52 = arith.constant 0 : i32
    %67 = arith.addi %66, %c0_i32_52 : i32
    %c0_53 = arith.constant 0 : index
    %68 = arith.index_cast %67 : i32 to index
    %c2_54 = arith.constant 2 : index
    %c0_55 = arith.constant 0 : index
    %69 = vector.load %arg2[%c0_53, %68, %c2_54, %c0_55] : memref<1x18x18x4xf32, #tpu.memory_space<vmem>>, vector<1x8x16x4xf32>
    %70 = vector.shape_cast %69 : vector<1x8x16x4xf32> to vector<8x16x4xf32>
    %c5 = arith.constant 5 : index
    %c0_56 = arith.constant 0 : index
    %c0_57 = arith.constant 0 : index
    %71 = vector.load %arg3[%c5, %c0_56, %c0_57] : memref<16x4x24xf32, #tpu.memory_space<vmem>>, vector<1x4x24xf32>
    %72 = vector.shape_cast %71 : vector<1x4x24xf32> to vector<4x24xf32>
    "tpu.trace_start"() <{level = 10 : i32, message = "twc,co->two"}> : () -> ()
    %cst_58 = arith.constant dense<0.000000e+00> : vector<8x16x24xf32>
    %73 = tpu.matmul %70, %72, %cst_58 {dimension_numbers = #tpu.dot_dimension_numbers<[2], [0], [0, 1], [1], [0, 0, 0, 1, 1, 1], [], []>} : vector<8x16x4xf32>, vector<4x24xf32>, vector<8x16x24xf32> -> vector<8x16x24xf32>
    "tpu.trace_stop"() : () -> ()
    %74 = arith.addf %65, %73 : vector<8x16x24xf32>
    %c0_i32_59 = arith.constant 0 : i32
    %75 = arith.addi %1, %c0_i32_59 : i32
    %c1_i32_60 = arith.constant 1 : i32
    %76 = arith.addi %75, %c1_i32_60 : i32
    %c0_61 = arith.constant 0 : index
    %77 = arith.index_cast %76 : i32 to index
    %c1_62 = arith.constant 1 : index
    %c0_63 = arith.constant 0 : index
    %78 = vector.load %arg2[%c0_61, %77, %c1_62, %c0_63] : memref<1x18x18x4xf32, #tpu.memory_space<vmem>>, vector<1x8x16x4xf32>
    %79 = vector.shape_cast %78 : vector<1x8x16x4xf32> to vector<8x16x4xf32>
    %c6 = arith.constant 6 : index
    %c0_64 = arith.constant 0 : index
    %c0_65 = arith.constant 0 : index
    %80 = vector.load %arg3[%c6, %c0_64, %c0_65] : memref<16x4x24xf32, #tpu.memory_space<vmem>>, vector<1x4x24xf32>
    %81 = vector.shape_cast %80 : vector<1x4x24xf32> to vector<4x24xf32>
    "tpu.trace_start"() <{level = 10 : i32, message = "twc,co->two"}> : () -> ()
    %cst_66 = arith.constant dense<0.000000e+00> : vector<8x16x24xf32>
    %82 = tpu.matmul %79, %81, %cst_66 {dimension_numbers = #tpu.dot_dimension_numbers<[2], [0], [0, 1], [1], [0, 0, 0, 1, 1, 1], [], []>} : vector<8x16x4xf32>, vector<4x24xf32>, vector<8x16x24xf32> -> vector<8x16x24xf32>
    "tpu.trace_stop"() : () -> ()
    %83 = arith.addf %74, %82 : vector<8x16x24xf32>
    %c0_i32_67 = arith.constant 0 : i32
    %84 = arith.addi %1, %c0_i32_67 : i32
    %c1_i32_68 = arith.constant 1 : i32
    %85 = arith.addi %84, %c1_i32_68 : i32
    %c0_69 = arith.constant 0 : index
    %86 = arith.index_cast %85 : i32 to index
    %c2_70 = arith.constant 2 : index
    %c0_71 = arith.constant 0 : index
    %87 = vector.load %arg2[%c0_69, %86, %c2_70, %c0_71] : memref<1x18x18x4xf32, #tpu.memory_space<vmem>>, vector<1x8x16x4xf32>
    %88 = vector.shape_cast %87 : vector<1x8x16x4xf32> to vector<8x16x4xf32>
    %c7 = arith.constant 7 : index
    %c0_72 = arith.constant 0 : index
    %c0_73 = arith.constant 0 : index
    %89 = vector.load %arg3[%c7, %c0_72, %c0_73] : memref<16x4x24xf32, #tpu.memory_space<vmem>>, vector<1x4x24xf32>
    %90 = vector.shape_cast %89 : vector<1x4x24xf32> to vector<4x24xf32>
    "tpu.trace_start"() <{level = 10 : i32, message = "twc,co->two"}> : () -> ()
    %cst_74 = arith.constant dense<0.000000e+00> : vector<8x16x24xf32>
    %91 = tpu.matmul %88, %90, %cst_74 {dimension_numbers = #tpu.dot_dimension_numbers<[2], [0], [0, 1], [1], [0, 0, 0, 1, 1, 1], [], []>} : vector<8x16x4xf32>, vector<4x24xf32>, vector<8x16x24xf32> -> vector<8x16x24xf32>
    "tpu.trace_stop"() : () -> ()
    %92 = arith.addf %83, %91 : vector<8x16x24xf32>
    %93 = vector.shape_cast %3 : vector<24xf32> to vector<1x1x24xf32>
    %94 = vector.broadcast %93 : vector<1x1x24xf32> to vector<8x16x24xf32>
    %95 = arith.addf %92, %94 : vector<8x16x24xf32>
    %cst_75 = arith.constant 3.000000e+00 : f32
    %96 = vector.broadcast %cst_75 : f32 to vector<8x16x24xf32>
    %97 = arith.addf %95, %96 : vector<8x16x24xf32>
    %cst_76 = arith.constant 0.000000e+00 : f32
    %cst_77 = arith.constant 6.000000e+00 : f32
    %98 = vector.broadcast %cst_76 : f32 to vector<8x16x24xf32>
    %99 = arith.maximumf %98, %97 : vector<8x16x24xf32>
    %100 = vector.broadcast %cst_77 : f32 to vector<8x16x24xf32>
    %101 = arith.minimumf %100, %99 : vector<8x16x24xf32>
    %102 = arith.mulf %95, %101 : vector<8x16x24xf32>
    %cst_78 = arith.constant 0.166666672 : f32
    %103 = vector.broadcast %cst_78 : f32 to vector<8x16x24xf32>
    %104 = arith.mulf %102, %103 : vector<8x16x24xf32>
    %c0_79 = arith.constant 0 : index
    %c0_80 = arith.constant 0 : index
    %c0_81 = arith.constant 0 : index
    %c1_82 = arith.constant 1 : index
    %c0_83 = arith.constant 0 : index
    %c0_84 = arith.constant 0 : index
    %105 = vector.load %arg5[%c0_79, %c0_80, %c0_81, %c1_82, %c0_83, %c0_84] : memref<1x8x2x2x16x24xf32, #tpu.memory_space<vmem>>, vector<1x8x1x1x16x24xf32>
    %106 = vector.shape_cast %105 : vector<1x8x1x1x16x24xf32> to vector<8x16x24xf32>
    %107 = vector.shape_cast %104 : vector<8x16x24xf32> to vector<1x8x1x1x16x24xf32>
    tpu.vector_store %arg5[%c0_79, %c0_80, %c0_81, %c1_82, %c0_83, %c0_84], %107 {strides = array<i32>} : memref<1x8x2x2x16x24xf32, #tpu.memory_space<vmem>>, vector<1x8x1x1x16x24xf32>,
    %cst_85 = arith.constant 0.000000e+00 : f32
    %108 = vector.broadcast %cst_85 : f32 to vector<8x16x24xf32>
    %c1_i32_86 = arith.constant 1 : i32
    %109 = arith.addi %1, %c1_i32_86 : i32
    %c0_i32_87 = arith.constant 0 : i32
    %110 = arith.addi %109, %c0_i32_87 : i32
    %c0_88 = arith.constant 0 : index
    %111 = arith.index_cast %110 : i32 to index
    %c0_89 = arith.constant 0 : index
    %c0_90 = arith.constant 0 : index
    %112 = vector.load %arg2[%c0_88, %111, %c0_89, %c0_90] : memref<1x18x18x4xf32, #tpu.memory_space<vmem>>, vector<1x8x16x4xf32>
    %113 = vector.shape_cast %112 : vector<1x8x16x4xf32> to vector<8x16x4xf32>
    %c8 = arith.constant 8 : index
    %c0_91 = arith.constant 0 : index
    %c0_92 = arith.constant 0 : index
    %114 = vector.load %arg3[%c8, %c0_91, %c0_92] : memref<16x4x24xf32, #tpu.memory_space<vmem>>, vector<1x4x24xf32>
    %115 = vector.shape_cast %114 : vector<1x4x24xf32> to vector<4x24xf32>
    "tpu.trace_start"() <{level = 10 : i32, message = "twc,co->two"}> : () -> ()
    %cst_93 = arith.constant dense<0.000000e+00> : vector<8x16x24xf32>
    %116 = tpu.matmul %113, %115, %cst_93 {dimension_numbers = #tpu.dot_dimension_numbers<[2], [0], [0, 1], [1], [0, 0, 0, 1, 1, 1], [], []>} : vector<8x16x4xf32>, vector<4x24xf32>, vector<8x16x24xf32> -> vector<8x16x24xf32>
    "tpu.trace_stop"() : () -> ()
    %117 = arith.addf %108, %116 : vector<8x16x24xf32>
    %c1_i32_94 = arith.constant 1 : i32
    %118 = arith.addi %1, %c1_i32_94 : i32
    %c0_i32_95 = arith.constant 0 : i32
    %119 = arith.addi %118, %c0_i32_95 : i32
    %c0_96 = arith.constant 0 : index
    %120 = arith.index_cast %119 : i32 to index
    %c1_97 = arith.constant 1 : index
    %c0_98 = arith.constant 0 : index
    %121 = vector.load %arg2[%c0_96, %120, %c1_97, %c0_98] : memref<1x18x18x4xf32, #tpu.memory_space<vmem>>, vector<1x8x16x4xf32>
    %122 = vector.shape_cast %121 : vector<1x8x16x4xf32> to vector<8x16x4xf32>
    %c9 = arith.constant 9 : index
    %c0_99 = arith.constant 0 : index
    %c0_100 = arith.constant 0 : index
    %123 = vector.load %arg3[%c9, %c0_99, %c0_100] : memref<16x4x24xf32, #tpu.memory_space<vmem>>, vector<1x4x24xf32>
    %124 = vector.shape_cast %123 : vector<1x4x24xf32> to vector<4x24xf32>
    "tpu.trace_start"() <{level = 10 : i32, message = "twc,co->two"}> : () -> ()
    %cst_101 = arith.constant dense<0.000000e+00> : vector<8x16x24xf32>
    %125 = tpu.matmul %122, %124, %cst_101 {dimension_numbers = #tpu.dot_dimension_numbers<[2], [0], [0, 1], [1], [0, 0, 0, 1, 1, 1], [], []>} : vector<8x16x4xf32>, vector<4x24xf32>, vector<8x16x24xf32> -> vector<8x16x24xf32>
    "tpu.trace_stop"() : () -> ()
    %126 = arith.addf %117, %125 : vector<8x16x24xf32>
    %c1_i32_102 = arith.constant 1 : i32
    %127 = arith.addi %1, %c1_i32_102 : i32
    %c1_i32_103 = arith.constant 1 : i32
    %128 = arith.addi %127, %c1_i32_103 : i32
    %c0_104 = arith.constant 0 : index
    %129 = arith.index_cast %128 : i32 to index
    %c0_105 = arith.constant 0 : index
    %c0_106 = arith.constant 0 : index
    %130 = vector.load %arg2[%c0_104, %129, %c0_105, %c0_106] : memref<1x18x18x4xf32, #tpu.memory_space<vmem>>, vector<1x8x16x4xf32>
    %131 = vector.shape_cast %130 : vector<1x8x16x4xf32> to vector<8x16x4xf32>
    %c10 = arith.constant 10 : index
    %c0_107 = arith.constant 0 : index
    %c0_108 = arith.constant 0 : index
    %132 = vector.load %arg3[%c10, %c0_107, %c0_108] : memref<16x4x24xf32, #tpu.memory_space<vmem>>, vector<1x4x24xf32>
    %133 = vector.shape_cast %132 : vector<1x4x24xf32> to vector<4x24xf32>
    "tpu.trace_start"() <{level = 10 : i32, message = "twc,co->two"}> : () -> ()
    %cst_109 = arith.constant dense<0.000000e+00> : vector<8x16x24xf32>
    %134 = tpu.matmul %131, %133, %cst_109 {dimension_numbers = #tpu.dot_dimension_numbers<[2], [0], [0, 1], [1], [0, 0, 0, 1, 1, 1], [], []>} : vector<8x16x4xf32>, vector<4x24xf32>, vector<8x16x24xf32> -> vector<8x16x24xf32>
    "tpu.trace_stop"() : () -> ()
    %135 = arith.addf %126, %134 : vector<8x16x24xf32>
    %c1_i32_110 = arith.constant 1 : i32
    %136 = arith.addi %1, %c1_i32_110 : i32
    %c1_i32_111 = arith.constant 1 : i32
    %137 = arith.addi %136, %c1_i32_111 : i32
    %c0_112 = arith.constant 0 : index
    %138 = arith.index_cast %137 : i32 to index
    %c1_113 = arith.constant 1 : index
    %c0_114 = arith.constant 0 : index
    %139 = vector.load %arg2[%c0_112, %138, %c1_113, %c0_114] : memref<1x18x18x4xf32, #tpu.memory_space<vmem>>, vector<1x8x16x4xf32>
    %140 = vector.shape_cast %139 : vector<1x8x16x4xf32> to vector<8x16x4xf32>
    %c11 = arith.constant 11 : index
    %c0_115 = arith.constant 0 : index
    %c0_116 = arith.constant 0 : index
    %141 = vector.load %arg3[%c11, %c0_115, %c0_116] : memref<16x4x24xf32, #tpu.memory_space<vmem>>, vector<1x4x24xf32>
    %142 = vector.shape_cast %141 : vector<1x4x24xf32> to vector<4x24xf32>
    "tpu.trace_start"() <{level = 10 : i32, message = "twc,co->two"}> : () -> ()
    %cst_117 = arith.constant dense<0.000000e+00> : vector<8x16x24xf32>
    %143 = tpu.matmul %140, %142, %cst_117 {dimension_numbers = #tpu.dot_dimension_numbers<[2], [0], [0, 1], [1], [0, 0, 0, 1, 1, 1], [], []>} : vector<8x16x4xf32>, vector<4x24xf32>, vector<8x16x24xf32> -> vector<8x16x24xf32>
    "tpu.trace_stop"() : () -> ()
    %144 = arith.addf %135, %143 : vector<8x16x24xf32>
    %145 = vector.shape_cast %3 : vector<24xf32> to vector<1x1x24xf32>
    %146 = vector.broadcast %145 : vector<1x1x24xf32> to vector<8x16x24xf32>
    %147 = arith.addf %144, %146 : vector<8x16x24xf32>
    %cst_118 = arith.constant 3.000000e+00 : f32
    %148 = vector.broadcast %cst_118 : f32 to vector<8x16x24xf32>
    %149 = arith.addf %147, %148 : vector<8x16x24xf32>
    %cst_119 = arith.constant 0.000000e+00 : f32
    %cst_120 = arith.constant 6.000000e+00 : f32
    %150 = vector.broadcast %cst_119 : f32 to vector<8x16x24xf32>
    %151 = arith.maximumf %150, %149 : vector<8x16x24xf32>
    %152 = vector.broadcast %cst_120 : f32 to vector<8x16x24xf32>
    %153 = arith.minimumf %152, %151 : vector<8x16x24xf32>
    %154 = arith.mulf %147, %153 : vector<8x16x24xf32>
    %cst_121 = arith.constant 0.166666672 : f32
    %155 = vector.broadcast %cst_121 : f32 to vector<8x16x24xf32>
    %156 = arith.mulf %154, %155 : vector<8x16x24xf32>
    %c0_122 = arith.constant 0 : index
    %c0_123 = arith.constant 0 : index
    %c1_124 = arith.constant 1 : index
    %c0_125 = arith.constant 0 : index
    %c0_126 = arith.constant 0 : index
    %c0_127 = arith.constant 0 : index
    %157 = vector.load %arg5[%c0_122, %c0_123, %c1_124, %c0_125, %c0_126, %c0_127] : memref<1x8x2x2x16x24xf32, #tpu.memory_space<vmem>>, vector<1x8x1x1x16x24xf32>
    %158 = vector.shape_cast %157 : vector<1x8x1x1x16x24xf32> to vector<8x16x24xf32>
    %159 = vector.shape_cast %156 : vector<8x16x24xf32> to vector<1x8x1x1x16x24xf32>
    tpu.vector_store %arg5[%c0_122, %c0_123, %c1_124, %c0_125, %c0_126, %c0_127], %159 {strides = array<i32>} : memref<1x8x2x2x16x24xf32, #tpu.memory_space<vmem>>, vector<1x8x1x1x16x24xf32>,
    %cst_128 = arith.constant 0.000000e+00 : f32
    %160 = vector.broadcast %cst_128 : f32 to vector<8x16x24xf32>
    %c1_i32_129 = arith.constant 1 : i32
    %161 = arith.addi %1, %c1_i32_129 : i32
    %c0_i32_130 = arith.constant 0 : i32
    %162 = arith.addi %161, %c0_i32_130 : i32
    %c0_131 = arith.constant 0 : index
    %163 = arith.index_cast %162 : i32 to index
    %c1_132 = arith.constant 1 : index
    %c0_133 = arith.constant 0 : index
    %164 = vector.load %arg2[%c0_131, %163, %c1_132, %c0_133] : memref<1x18x18x4xf32, #tpu.memory_space<vmem>>, vector<1x8x16x4xf32>
    %165 = vector.shape_cast %164 : vector<1x8x16x4xf32> to vector<8x16x4xf32>
    %c12 = arith.constant 12 : index
    %c0_134 = arith.constant 0 : index
    %c0_135 = arith.constant 0 : index
    %166 = vector.load %arg3[%c12, %c0_134, %c0_135] : memref<16x4x24xf32, #tpu.memory_space<vmem>>, vector<1x4x24xf32>
    %167 = vector.shape_cast %166 : vector<1x4x24xf32> to vector<4x24xf32>
    "tpu.trace_start"() <{level = 10 : i32, message = "twc,co->two"}> : () -> ()
    %cst_136 = arith.constant dense<0.000000e+00> : vector<8x16x24xf32>
    %168 = tpu.matmul %165, %167, %cst_136 {dimension_numbers = #tpu.dot_dimension_numbers<[2], [0], [0, 1], [1], [0, 0, 0, 1, 1, 1], [], []>} : vector<8x16x4xf32>, vector<4x24xf32>, vector<8x16x24xf32> -> vector<8x16x24xf32>
    "tpu.trace_stop"() : () -> ()
    %169 = arith.addf %160, %168 : vector<8x16x24xf32>
    %c1_i32_137 = arith.constant 1 : i32
    %170 = arith.addi %1, %c1_i32_137 : i32
    %c0_i32_138 = arith.constant 0 : i32
    %171 = arith.addi %170, %c0_i32_138 : i32
    %c0_139 = arith.constant 0 : index
    %172 = arith.index_cast %171 : i32 to index
    %c2_140 = arith.constant 2 : index
    %c0_141 = arith.constant 0 : index
    %173 = vector.load %arg2[%c0_139, %172, %c2_140, %c0_141] : memref<1x18x18x4xf32, #tpu.memory_space<vmem>>, vector<1x8x16x4xf32>
    %174 = vector.shape_cast %173 : vector<1x8x16x4xf32> to vector<8x16x4xf32>
    %c13 = arith.constant 13 : index
    %c0_142 = arith.constant 0 : index
    %c0_143 = arith.constant 0 : index
    %175 = vector.load %arg3[%c13, %c0_142, %c0_143] : memref<16x4x24xf32, #tpu.memory_space<vmem>>, vector<1x4x24xf32>
    %176 = vector.shape_cast %175 : vector<1x4x24xf32> to vector<4x24xf32>
    "tpu.trace_start"() <{level = 10 : i32, message = "twc,co->two"}> : () -> ()
    %cst_144 = arith.constant dense<0.000000e+00> : vector<8x16x24xf32>
    %177 = tpu.matmul %174, %176, %cst_144 {dimension_numbers = #tpu.dot_dimension_numbers<[2], [0], [0, 1], [1], [0, 0, 0, 1, 1, 1], [], []>} : vector<8x16x4xf32>, vector<4x24xf32>, vector<8x16x24xf32> -> vector<8x16x24xf32>
    "tpu.trace_stop"() : () -> ()
    %178 = arith.addf %169, %177 : vector<8x16x24xf32>
    %c1_i32_145 = arith.constant 1 : i32
    %179 = arith.addi %1, %c1_i32_145 : i32
    %c1_i32_146 = arith.constant 1 : i32
    %180 = arith.addi %179, %c1_i32_146 : i32
    %c0_147 = arith.constant 0 : index
    %181 = arith.index_cast %180 : i32 to index
    %c1_148 = arith.constant 1 : index
    %c0_149 = arith.constant 0 : index
    %182 = vector.load %arg2[%c0_147, %181, %c1_148, %c0_149] : memref<1x18x18x4xf32, #tpu.memory_space<vmem>>, vector<1x8x16x4xf32>
    %183 = vector.shape_cast %182 : vector<1x8x16x4xf32> to vector<8x16x4xf32>
    %c14 = arith.constant 14 : index
    %c0_150 = arith.constant 0 : index
    %c0_151 = arith.constant 0 : index
    %184 = vector.load %arg3[%c14, %c0_150, %c0_151] : memref<16x4x24xf32, #tpu.memory_space<vmem>>, vector<1x4x24xf32>
    %185 = vector.shape_cast %184 : vector<1x4x24xf32> to vector<4x24xf32>
    "tpu.trace_start"() <{level = 10 : i32, message = "twc,co->two"}> : () -> ()
    %cst_152 = arith.constant dense<0.000000e+00> : vector<8x16x24xf32>
    %186 = tpu.matmul %183, %185, %cst_152 {dimension_numbers = #tpu.dot_dimension_numbers<[2], [0], [0, 1], [1], [0, 0, 0, 1, 1, 1], [], []>} : vector<8x16x4xf32>, vector<4x24xf32>, vector<8x16x24xf32> -> vector<8x16x24xf32>
    "tpu.trace_stop"() : () -> ()
    %187 = arith.addf %178, %186 : vector<8x16x24xf32>
    %c1_i32_153 = arith.constant 1 : i32
    %188 = arith.addi %1, %c1_i32_153 : i32
    %c1_i32_154 = arith.constant 1 : i32
    %189 = arith.addi %188, %c1_i32_154 : i32
    %c0_155 = arith.constant 0 : index
    %190 = arith.index_cast %189 : i32 to index
    %c2_156 = arith.constant 2 : index
    %c0_157 = arith.constant 0 : index
    %191 = vector.load %arg2[%c0_155, %190, %c2_156, %c0_157] : memref<1x18x18x4xf32, #tpu.memory_space<vmem>>, vector<1x8x16x4xf32>
    %192 = vector.shape_cast %191 : vector<1x8x16x4xf32> to vector<8x16x4xf32>
    %c15 = arith.constant 15 : index
    %c0_158 = arith.constant 0 : index
    %c0_159 = arith.constant 0 : index
    %193 = vector.load %arg3[%c15, %c0_158, %c0_159] : memref<16x4x24xf32, #tpu.memory_space<vmem>>, vector<1x4x24xf32>
    %194 = vector.shape_cast %193 : vector<1x4x24xf32> to vector<4x24xf32>
    "tpu.trace_start"() <{level = 10 : i32, message = "twc,co->two"}> : () -> ()
    %cst_160 = arith.constant dense<0.000000e+00> : vector<8x16x24xf32>
    %195 = tpu.matmul %192, %194, %cst_160 {dimension_numbers = #tpu.dot_dimension_numbers<[2], [0], [0, 1], [1], [0, 0, 0, 1, 1, 1], [], []>} : vector<8x16x4xf32>, vector<4x24xf32>, vector<8x16x24xf32> -> vector<8x16x24xf32>
    "tpu.trace_stop"() : () -> ()
    %196 = arith.addf %187, %195 : vector<8x16x24xf32>
    %197 = vector.shape_cast %3 : vector<24xf32> to vector<1x1x24xf32>
    %198 = vector.broadcast %197 : vector<1x1x24xf32> to vector<8x16x24xf32>
    %199 = arith.addf %196, %198 : vector<8x16x24xf32>
    %cst_161 = arith.constant 3.000000e+00 : f32
    %200 = vector.broadcast %cst_161 : f32 to vector<8x16x24xf32>
    %201 = arith.addf %199, %200 : vector<8x16x24xf32>
    %cst_162 = arith.constant 0.000000e+00 : f32
    %cst_163 = arith.constant 6.000000e+00 : f32
    %202 = vector.broadcast %cst_162 : f32 to vector<8x16x24xf32>
    %203 = arith.maximumf %202, %201 : vector<8x16x24xf32>
    %204 = vector.broadcast %cst_163 : f32 to vector<8x16x24xf32>
    %205 = arith.minimumf %204, %203 : vector<8x16x24xf32>
    %206 = arith.mulf %199, %205 : vector<8x16x24xf32>
    %cst_164 = arith.constant 0.166666672 : f32
    %207 = vector.broadcast %cst_164 : f32 to vector<8x16x24xf32>
    %208 = arith.mulf %206, %207 : vector<8x16x24xf32>
    %c0_165 = arith.constant 0 : index
    %c0_166 = arith.constant 0 : index
    %c1_167 = arith.constant 1 : index
    %c1_168 = arith.constant 1 : index
    %c0_169 = arith.constant 0 : index
    %c0_170 = arith.constant 0 : index
    %209 = vector.load %arg5[%c0_165, %c0_166, %c1_167, %c1_168, %c0_169, %c0_170] : memref<1x8x2x2x16x24xf32, #tpu.memory_space<vmem>>, vector<1x8x1x1x16x24xf32>
    %210 = vector.shape_cast %209 : vector<1x8x1x1x16x24xf32> to vector<8x16x24xf32>
    %211 = vector.shape_cast %208 : vector<8x16x24xf32> to vector<1x8x1x1x16x24xf32>
    tpu.vector_store %arg5[%c0_165, %c0_166, %c1_167, %c1_168, %c0_169, %c0_170], %211 {strides = array<i32>} : memref<1x8x2x2x16x24xf32, #tpu.memory_space<vmem>>, vector<1x8x1x1x16x24xf32>,
    return
  }
  func.func @transform_0(%arg0: i32, %arg1: i32) -> (i32, i32, i32, i32) {
    %c0_i32 = arith.constant 0 : i32
    %c0_i32_0 = arith.constant 0 : i32
    %c0_i32_1 = arith.constant 0 : i32
    %c0_i32_2 = arith.constant 0 : i32
    return %arg0, %c0_i32, %c0_i32_0, %c0_i32_1 : i32, i32, i32, i32
  }
  func.func @transform_1(%arg0: i32, %arg1: i32) -> (i32, i32, i32) {
    %c0_i32 = arith.constant 0 : i32
    %c0_i32_0 = arith.constant 0 : i32
    %c0_i32_1 = arith.constant 0 : i32
    %c0_i32_2 = arith.constant 0 : i32
    return %c0_i32, %c0_i32_0, %c0_i32_1 : i32, i32, i32
  }
  func.func @transform_2(%arg0: i32, %arg1: i32) -> (i32, i32) {
    %c0_i32 = arith.constant 0 : i32
    %c0_i32_0 = arith.constant 0 : i32
    %c0_i32_1 = arith.constant 0 : i32
    return %c0_i32, %c0_i32_0 : i32, i32
  }
  func.func @transform_3(%arg0: i32, %arg1: i32) -> (i32, i32, i32, i32, i32, i32) {
    %c0_i32 = arith.constant 0 : i32
    %c0_i32_0 = arith.constant 0 : i32
    %c0_i32_1 = arith.constant 0 : i32
    %c0_i32_2 = arith.constant 0 : i32
    %c0_i32_3 = arith.constant 0 : i32
    return %arg0, %arg1, %c0_i32, %c0_i32_0, %c0_i32_1, %c0_i32_2 : i32, i32, i32, i32, i32, i32
  }
}

</mosaic_0001>

<llo_original>
// kernel: up_module_forward.1
$region0: #{up_module_forward.1}
  #allocation0 [shape = 'u32[]', space=smem, size = 0x4, offset = 0x4, fixed_abs, tag = 'smem constant byte address 0x4 - core index']
  #allocation1 [shape = 'u32[72,128]{1,0:T(1,128)}', space=vmem, size = 0x9000, scoped, tag = 'internal scratch']
  %s0 = inlined_call_operand.vmem [shape: f32[2,18,18,4], index: 0, kind: input, shape index: {}]
  %s1 = inlined_call_operand.vmem [shape: f32[16,4,24], index: 1, kind: input, shape index: {}]
  %s2 = inlined_call_operand.vmem [shape: f32[1,24], index: 2, kind: input, shape index: {}]
  %s3 = inlined_call_operand.vmem [shape: f32[2,16,2,2,16,24], index: 3, kind: output, shape index: {}]
  %s4 = sld [smem:[#allocation0]]
  $region45: #{up_module_forward.1} parent=0
    _
  %s6 = ssub.s32 1, %s4
  %s7 = scalar_select 0, %s6, %s4
  loop: start=0, step=1, limit=6
  $region2: #{up_module_forward.1} parent=0 // loop_pre_header
    _
  $region3: #{up_module_forward.1} parent=0 // loop_header
    %s9 = sphi 0, %s13
    %p10 = scmp.ge.s32.totalorder %s9, 6
    %s16 = sphi 0, %s28
    %s17 = sphi 0, %s24
    %s18 = sphi 0, %s16
    %s19 = sphi 0, %s17
    %s20 = sphi 0, %s18
    %s21 = sphi 0, %s19
    %s31 = sphi 0, %s33
    %s34 = sphi 0, %s31
    %s35 = sphi 0, %s34
    %s51 = sphi 0, %s35
    %s55 = sphi 0, %s55
    %s57 = sphi 0, %s55
    %s58 = sphi 0, %s57
    %s72 = sphi 0, %s58
    %s76 = sphi 0, %s76
    %s78 = sphi 0, %s76
    %s79 = sphi 0, %s78
    %s93 = sphi 0, %s79
    %s101 = sphi 0, %s103
    %s104 = sphi 0, %s101
    %s105 = sphi 0, %s104
    %s121 = sphi 0, %s105
  $region4: #{up_module_forward.1} parent=0 // loop_header_branch
    %12 = sbr.rel (%p10) target = $region8
  $region5: #{up_module_forward.1} parent=0 // loop_body
    %s14 = ssub.s32 %s9, 1
    %s15 = ssub.s32 %s9, 2
    %s22 = sadd.s32 1, %s17
    %p23 = scmp.ge.s32.totalorder %s22, 2
    %s24 = scalar_select %p23, 0, %s22
    %s25 = sadd.s32 1, %s16
    %s26 = scalar_select %p23, %s25, %s16
    %p27 = scmp.ge.s32.totalorder %s26, 2
    %s28 = scalar_select %p27, 0, %s26
    %s29 = ssub.s32 %s16, %s28
    %p30 = scmp.eq.s32.totalorder %s29, 0
    %s32 = sadd.s32 %s31, 1
    %s33 = scalar_select %p30, %s31, %s32
    %p36 = pneg %p30
    %p37 = scmp.eq.s32.totalorder %s9, 3
    %p38 = por %p36, %p37
    %p39 = scmp.ne.s32.totalorder %s31, %s34
    %p40 = scmp.eq.s32.totalorder %s9, 0
    %p41 = por %p39, %p40
    %p42 = scmp.ne.s32.totalorder %s31, %s34
    %p43 = scmp.eq.s32.totalorder %s14, 3
    %p44 = por %p42, %p43
    %p45 = scmp.ne.s32.totalorder %s34, %s35
    %p46 = scmp.eq.s32.totalorder %s14, 0
    %p47 = por %p45, %p46
    %p48 = scmp.ne.s32.totalorder %s34, %s35
    %p49 = scmp.eq.s32.totalorder %s15, 3
    %p50 = por %p48, %p49
    %p52 = scmp.ne.s32.totalorder %s35, %s51
    %p53 = scmp.eq.s32.totalorder %s15, 0
    %p54 = por %p52, %p53
    %s56 = sadd.s32 %s55, 1
    %p59 = scmp.eq.s32.totalorder %s9, 3
    %p60 = scmp.ne.s32.totalorder %s55, %s57
    %p61 = scmp.eq.s32.totalorder %s9, 0
    %p62 = por %p60, %p61
    %p63 = scmp.ne.s32.totalorder %s55, %s57
    %p64 = scmp.eq.s32.totalorder %s14, 3
    %p65 = por %p63, %p64
    %p66 = scmp.ne.s32.totalorder %s57, %s58
    %p67 = scmp.eq.s32.totalorder %s14, 0
    %p68 = por %p66, %p67
    %p69 = scmp.ne.s32.totalorder %s57, %s58
    %p70 = scmp.eq.s32.totalorder %s15, 3
    %p71 = por %p69, %p70
    %p73 = scmp.ne.s32.totalorder %s58, %s72
    %p74 = scmp.eq.s32.totalorder %s15, 0
    %p75 = por %p73, %p74
    %s77 = sadd.s32 %s76, 1
    %p80 = scmp.eq.s32.totalorder %s9, 3
    %p81 = scmp.ne.s32.totalorder %s76, %s78
    %p82 = scmp.eq.s32.totalorder %s9, 0
    %p83 = por %p81, %p82
    %p84 = scmp.ne.s32.totalorder %s76, %s78
    %p85 = scmp.eq.s32.totalorder %s14, 3
    %p86 = por %p84, %p85
    %p87 = scmp.ne.s32.totalorder %s78, %s79
    %p88 = scmp.eq.s32.totalorder %s14, 0
    %p89 = por %p87, %p88
    %p90 = scmp.ne.s32.totalorder %s78, %s79
    %p91 = scmp.eq.s32.totalorder %s15, 3
    %p92 = por %p90, %p91
    %p94 = scmp.ne.s32.totalorder %s79, %s93
    %p95 = scmp.eq.s32.totalorder %s15, 0
    %p96 = por %p94, %p95
    %s97 = ssub.s32 %s16, %s28
    %s98 = ssub.s32 %s17, %s24
    %s99 = sor.u32 %s97, %s98
    %p100 = scmp.eq.s32.totalorder %s99, 0
    %s102 = sadd.s32 %s101, 1
    %s103 = scalar_select %p100, %s101, %s102
    %p106 = pneg %p100
    %p107 = scmp.eq.s32.totalorder %s9, 3
    %p108 = por %p106, %p107
    %p109 = scmp.ne.s32.totalorder %s101, %s104
    %p110 = scmp.eq.s32.totalorder %s9, 0
    %p111 = por %p109, %p110
    %p112 = scmp.ne.s32.totalorder %s101, %s104
    %p113 = scmp.eq.s32.totalorder %s14, 3
    %p114 = por %p112, %p113
    %p115 = scmp.ne.s32.totalorder %s104, %s105
    %p116 = scmp.eq.s32.totalorder %s14, 0
    %p117 = por %p115, %p116
    %p118 = scmp.ne.s32.totalorder %s104, %s105
    %p119 = scmp.eq.s32.totalorder %s15, 3
    %p120 = por %p118, %p119
    %p122 = scmp.ne.s32.totalorder %s105, %s121
    %p123 = scmp.eq.s32.totalorder %s15, 0
    %p124 = por %p122, %p123
    %p125 = scmp.le.s32.totalorder 1, %s9
    %p126 = scmp.lt.s32.totalorder %s9, 5
    %p127 = pnand %p125, %p126
    %p128 = pneg %p127
    // Predicated region
    $region9: #{up_module_forward.1} parent=5 // pred_check
      _
    $region10: #{up_module_forward.1} parent=5 // pred_check_branch
      %130 = sbr.rel (%p127) target = $region12
    $region11: #{up_module_forward.1} parent=5 // pred_region
      %s131 = ssub.s32 %s9, 1
      // Predicated region
      $region13: #{up_module_forward.1} parent=11 // pred_check
        %p132 = pneg %p68
      $region14: #{up_module_forward.1} parent=11 // pred_check_branch
        %134 = sbr.rel (%p132) target = $region16
      $region15: #{up_module_forward.1} parent=11 // pred_region
        _
      $region16: #{up_module_forward.1} parent=11 // pred_fallthru
        _
      // Predicated region
      $region17: #{up_module_forward.1} parent=11 // pred_check
        %p135 = pneg %p89
      $region18: #{up_module_forward.1} parent=11 // pred_check_branch
        %137 = sbr.rel (%p135) target = $region20
      $region19: #{up_module_forward.1} parent=11 // pred_region
        _
      $region20: #{up_module_forward.1} parent=11 // pred_fallthru
        _
    $region12: #{up_module_forward.1} parent=5 // pred_fallthru
      _
    %p138 = scmp.lt.s32.totalorder %s9, 4
    // Predicated region
    $region21: #{up_module_forward.1} parent=5 // pred_check
      %p139 = pneg %p138
    $region22: #{up_module_forward.1} parent=5 // pred_check_branch
      %141 = sbr.rel (%p139) target = $region24
    $region23: #{up_module_forward.1} parent=5 // pred_region
      // Predicated region
      $region25: #{up_module_forward.1} parent=23 // pred_check
        %p142 = pneg %p41
      $region26: #{up_module_forward.1} parent=23 // pred_check_branch
        %144 = sbr.rel (%p142) target = $region28
      $region27: #{up_module_forward.1} parent=23 // pred_region
        %p145 = scmp.lt.s32.totalorder %s16, 1
        %s146 = scalar_select %p145, %s16, 1
        %s147 = smul.addr %s146, 54
        %s148 = smul.addr %s147, 8
        %s149 = scalar_lea.vmem %s0, %s148
      $region28: #{up_module_forward.1} parent=23 // pred_fallthru
        _
    $region24: #{up_module_forward.1} parent=5 // pred_fallthru
      _
    %p150 = scmp.le.s32.totalorder 1, %s9
    %p151 = scmp.lt.s32.totalorder %s9, 5
    %p152 = pnand %p150, %p151
    %p153 = pneg %p152
    // Predicated region
    $region29: #{up_module_forward.1} parent=5 // pred_check
      _
    $region30: #{up_module_forward.1} parent=5 // pred_check_branch
      %155 = sbr.rel (%p152) target = $region32
    $region31: #{up_module_forward.1} parent=5 // pred_region
      %s156 = ssub.s32 %s9, 1
      %p157 = scmp.lt.s32.totalorder %s18, 1
      %s158 = scalar_select %p157, %s18, 1
      %s159 = smul.addr %s158, 54
      %s160 = smul.addr %s159, 8
      %s161 = scalar_lea.vmem %s0, %s160
      %p162 = pneg %p47
      %p163 = pneg %p44
      %p164 = pneg %p68
      %p165 = pneg %p65
      %p166 = pneg %p89
      %p167 = pneg %p86
      %p168 = pneg %p117
      %p169 = pneg %p114
      %s170 = smul.u32 8, %s19
      %p171 = scmp.lt.s32.totalorder %s18, 1
      %s172 = scalar_select %p171, %s18, 1
      %p173 = scmp.lt.s32.totalorder %s170, 15
      %s174 = scalar_select %p173, %s170, 15
      %s175 = smul.addr %s174, 8
      %s176 = smul.addr %s172, 128
      %s177 = sadd.s32 %s175, %s176
      %s178 = smul.addr %s177, 8
      %s179 = scalar_lea.vmem %s3, %s178
      %p180 = scmp.lt.s32.totalorder %s18, 1
      %s181 = scalar_select %p180, %s18, 1
      %s182 = smul.addr %s181, 54
      %s183 = smul.addr %s182, 8
      %s184 = scalar_lea.vmem %s0, %s183
      %s185 = smul.u32 8, %s19
      %p186 = scmp.lt.s32.totalorder %s18, 1
      %s187 = scalar_select %p186, %s18, 1
      %p188 = scmp.lt.s32.totalorder %s185, 15
      %s189 = scalar_select %p188, %s185, 15
      %s190 = smul.addr %s189, 8
      %s191 = smul.addr %s187, 128
      %s192 = sadd.s32 %s190, %s191
      %s193 = smul.addr %s192, 8
      %s194 = scalar_lea.vmem %s3, %s193
      %s195 = smul.u32 8, %s19
      %s196 = smul.u32 %s19, 8
      %v197 = vld [vmem:[%s2] sm:$0x1]
      %s198 = smul.u32 %s196, 24
      %s199 = scalar_lea.vmem %s184, %s198
      %v200 = vld [vmem:[%s199] sm:$0xff]
      %v201 = vld [vmem:[%s199 + $0x8] sm:$0xff]
      %v202 = vld [vmem:[%s199 + $0x18] sm:$0xff]
      %v203 = vld [vmem:[%s199 + $0x20] sm:$0xff]
      %v204 = vld [vmem:[%s199 + $0x30] sm:$0xff]
      %v205 = vld [vmem:[%s199 + $0x38] sm:$0xff]
      %v206 = vld [vmem:[%s199 + $0x48] sm:$0xff]
      %v207 = vld [vmem:[%s199 + $0x50] sm:$0xff]
      %v208 = vld [vmem:[%s199 + $0x60] sm:$0xff]
      %v209 = vld [vmem:[%s199 + $0x68] sm:$0xff]
      %v210 = vld [vmem:[%s199 + $0x78] sm:$0xff]
      %v211 = vld [vmem:[%s199 + $0x80] sm:$0xff]
      %v212 = vld [vmem:[%s199 + $0x90] sm:$0xff]
      %v213 = vld [vmem:[%s199 + $0x98] sm:$0xff]
      %v214 = vld [vmem:[%s199 + $0xa8] sm:$0xff]
      %v215 = vld [vmem:[%s199 + $0xb0] sm:$0xff]
      %v216 = vld [vmem:[%s1] sm:$0xf]
      %v217 = vld [vmem:[%s199 + $0x1] sm:$0xff]
      %v218 = vld [vmem:[%s199 + $0x9] sm:$0xff]
      %v219 = vld [vmem:[%s199 + $0x19] sm:$0xff]
      %v220 = vld [vmem:[%s199 + $0x21] sm:$0xff]
      %v221 = vld [vmem:[%s199 + $0x31] sm:$0xff]
      %v222 = vld [vmem:[%s199 + $0x39] sm:$0xff]
      %v223 = vld [vmem:[%s199 + $0x49] sm:$0xff]
      %v224 = vld [vmem:[%s199 + $0x51] sm:$0xff]
      %v225 = vld [vmem:[%s199 + $0x61] sm:$0xff]
      %v226 = vld [vmem:[%s199 + $0x69] sm:$0xff]
      %v227 = vld [vmem:[%s199 + $0x79] sm:$0xff]
      %v228 = vld [vmem:[%s199 + $0x81] sm:$0xff]
      %v229 = vld [vmem:[%s199 + $0x91] sm:$0xff]
      %v230 = vld [vmem:[%s199 + $0x99] sm:$0xff]
      %v231 = vld [vmem:[%s199 + $0xa9] sm:$0xff]
      %v232 = vld [vmem:[%s199 + $0xb1] sm:$0xff]
      %s233 = scalar_lea.vmem %s1, 4
      %v234 = vld [vmem:[%s233] sm:$0xf]
      %vm235 = vcmask 31744
      %v237 = vsel %vm235, %v217, 0
      %v240 = vsel %vm235, %v218, 0
      %v243 = vsel %vm235, %v219, 0
      %v246 = vsel %vm235, %v220, 0
      %v249 = vsel %vm235, %v221, 0
      %v252 = vsel %vm235, %v222, 0
      %v255 = vsel %vm235, %v223, 0
      %v258 = vsel %vm235, %v224, 0
      %v261 = vsel %vm235, %v225, 0
      %v264 = vsel %vm235, %v226, 0
      %v267 = vsel %vm235, %v227, 0
      %v270 = vsel %vm235, %v228, 0
      %v273 = vsel %vm235, %v229, 0
      %v276 = vsel %vm235, %v230, 0
      %v279 = vsel %vm235, %v231, 0
      %v282 = vsel %vm235, %v232, 0
      %vm284 = vcmask 1043456
      %v286 = vsel %vm284, %v234, 0
      %288 = vmatpush.msra.mxu0 0.0
      %289 = vmatpush.msra.mxu0 0.0
      %290 = vmatpush.msra.mxu0 0.0
      %291 = vmatpush.msra.mxu0 0.0
      %292 = vmatpush.msra.mxu0 0.0
      %293 = vmatpush.msra.mxu0 0.0
      %294 = vmatpush.msra.mxu0 0.0
      %295 = vmatpush.msra.mxu0 0.0
      %296 = vmatpush.msra.mxu0 0.0
      %297 = vmatpush.msra.mxu0 0.0
      %298 = vmatpush.msra.mxu0 0.0
      %299 = vmatpush.msra.mxu0 0.0
      %300 = vmatpush.msra.mxu0 0.0
      %301 = vmatpush.msra.mxu0 0.0
      %302 = vmatpush.msra.mxu0 0.0
      %303 = vmatpush.msra.mxu0 %v286
      %304 = vmatmul.f32.gmra.mxu0 %v237
      %v305 = vpop.f32.mrf.mxu0
      %v306 = vadd.f32 0.0, %v305
      %307 = vmatmul.f32.gmra.mxu0 %v240
      %v308 = vpop.f32.mrf.mxu0
      %v309 = vadd.f32 0.0, %v308
      %310 = vmatmul.f32.gmra.mxu0 %v243
      %v311 = vpop.f32.mrf.mxu0
      %v312 = vadd.f32 0.0, %v311
      %313 = vmatmul.f32.gmra.mxu0 %v246
      %v314 = vpop.f32.mrf.mxu0
      %v315 = vadd.f32 0.0, %v314
      %316 = vmatmul.f32.gmra.mxu0 %v249
      %v317 = vpop.f32.mrf.mxu0
      %v318 = vadd.f32 0.0, %v317
      %319 = vmatmul.f32.gmra.mxu0 %v252
      %v320 = vpop.f32.mrf.mxu0
      %v321 = vadd.f32 0.0, %v320
      %322 = vmatmul.f32.gmra.mxu0 %v255
      %v323 = vpop.f32.mrf.mxu0
      %v324 = vadd.f32 0.0, %v323
      %325 = vmatmul.f32.gmra.mxu0 %v258
      %v326 = vpop.f32.mrf.mxu0
      %v327 = vadd.f32 0.0, %v326
      %328 = vmatmul.f32.gmra.mxu0 %v261
      %v329 = vpop.f32.mrf.mxu0
      %v330 = vadd.f32 0.0, %v329
      %331 = vmatmul.f32.gmra.mxu0 %v264
      %v332 = vpop.f32.mrf.mxu0
      %v333 = vadd.f32 0.0, %v332
      %334 = vmatmul.f32.gmra.mxu0 %v267
      %v335 = vpop.f32.mrf.mxu0
      %v336 = vadd.f32 0.0, %v335
      %337 = vmatmul.f32.gmra.mxu0 %v270
      %v338 = vpop.f32.mrf.mxu0
      %v339 = vadd.f32 0.0, %v338
      %340 = vmatmul.f32.gmra.mxu0 %v273
      %v341 = vpop.f32.mrf.mxu0
      %v342 = vadd.f32 0.0, %v341
      %343 = vmatmul.f32.gmra.mxu0 %v276
      %v344 = vpop.f32.mrf.mxu0
      %v345 = vadd.f32 0.0, %v344
      %346 = vmatmul.f32.gmra.mxu0 %v279
      %v347 = vpop.f32.mrf.mxu0
      %v348 = vadd.f32 0.0, %v347
      %349 = vmatmul.f32.gmra.mxu0 %v282
      %v350 = vpop.f32.mrf.mxu0
      %v351 = vadd.f32 0.0, %v350
      %352 = vdwg.mxu0
      %v354 = vsel %vm235, %v200, 0
      %v357 = vsel %vm235, %v201, 0
      %v360 = vsel %vm235, %v202, 0
      %v363 = vsel %vm235, %v203, 0
      %v366 = vsel %vm235, %v204, 0
      %v369 = vsel %vm235, %v205, 0
      %v372 = vsel %vm235, %v206, 0
      %v375 = vsel %vm235, %v207, 0
      %v378 = vsel %vm235, %v208, 0
      %v381 = vsel %vm235, %v209, 0
      %v384 = vsel %vm235, %v210, 0
      %v387 = vsel %vm235, %v211, 0
      %v390 = vsel %vm235, %v212, 0
      %v393 = vsel %vm235, %v213, 0
      %v396 = vsel %vm235, %v214, 0
      %v399 = vsel %vm235, %v215, 0
      %v402 = vsel %vm284, %v216, 0
      %404 = vmatpush.msra.mxu0 0.0
      %405 = vmatpush.msra.mxu0 0.0
      %406 = vmatpush.msra.mxu0 0.0
      %407 = vmatpush.msra.mxu0 0.0
      %408 = vmatpush.msra.mxu0 0.0
      %409 = vmatpush.msra.mxu0 0.0
      %410 = vmatpush.msra.mxu0 0.0
      %411 = vmatpush.msra.mxu0 0.0
      %412 = vmatpush.msra.mxu0 0.0
      %413 = vmatpush.msra.mxu0 0.0
      %414 = vmatpush.msra.mxu0 0.0
      %415 = vmatpush.msra.mxu0 0.0
      %416 = vmatpush.msra.mxu0 0.0
      %417 = vmatpush.msra.mxu0 0.0
      %418 = vmatpush.msra.mxu0 0.0
      %419 = vmatpush.msra.mxu0 %v402
      %420 = vmatmul.f32.gmra.mxu0 %v354
      %v421 = vpop.f32.mrf.mxu0
      %v422 = vadd.f32 %v306, %v421
      %423 = vmatmul.f32.gmra.mxu0 %v357
      %v424 = vpop.f32.mrf.mxu0
      %v425 = vadd.f32 %v309, %v424
      %426 = vmatmul.f32.gmra.mxu0 %v360
      %v427 = vpop.f32.mrf.mxu0
      %v428 = vadd.f32 %v312, %v427
      %429 = vmatmul.f32.gmra.mxu0 %v363
      %v430 = vpop.f32.mrf.mxu0
      %v431 = vadd.f32 %v315, %v430
      %432 = vmatmul.f32.gmra.mxu0 %v366
      %v433 = vpop.f32.mrf.mxu0
      %v434 = vadd.f32 %v318, %v433
      %435 = vmatmul.f32.gmra.mxu0 %v369
      %v436 = vpop.f32.mrf.mxu0
      %v437 = vadd.f32 %v321, %v436
      %438 = vmatmul.f32.gmra.mxu0 %v372
      %v439 = vpop.f32.mrf.mxu0
      %v440 = vadd.f32 %v324, %v439
      %441 = vmatmul.f32.gmra.mxu0 %v375
      %v442 = vpop.f32.mrf.mxu0
      %v443 = vadd.f32 %v327, %v442
      %444 = vmatmul.f32.gmra.mxu0 %v378
      %v445 = vpop.f32.mrf.mxu0
      %v446 = vadd.f32 %v330, %v445
      %447 = vmatmul.f32.gmra.mxu0 %v381
      %v448 = vpop.f32.mrf.mxu0
      %v449 = vadd.f32 %v333, %v448
      %450 = vmatmul.f32.gmra.mxu0 %v384
      %v451 = vpop.f32.mrf.mxu0
      %v452 = vadd.f32 %v336, %v451
      %453 = vmatmul.f32.gmra.mxu0 %v387
      %v454 = vpop.f32.mrf.mxu0
      %v455 = vadd.f32 %v339, %v454
      %456 = vmatmul.f32.gmra.mxu0 %v390
      %v457 = vpop.f32.mrf.mxu0
      %v458 = vadd.f32 %v342, %v457
      %459 = vmatmul.f32.gmra.mxu0 %v393
      %v460 = vpop.f32.mrf.mxu0
      %v461 = vadd.f32 %v345, %v460
      %462 = vmatmul.f32.gmra.mxu0 %v396
      %v463 = vpop.f32.mrf.mxu0
      %v464 = vadd.f32 %v348, %v463
      %465 = vmatmul.f32.gmra.mxu0 %v399
      %v466 = vpop.f32.mrf.mxu0
      %v467 = vadd.f32 %v351, %v466
      %468 = vdwg.mxu0
      %s469 = sadd.s32 %s196, 1
      %s470 = smul.u32 %s469, 24
      %s471 = scalar_lea.vmem %s184, %s470
      %v472 = vld [vmem:[%s471] sm:$0xff]
      %v473 = vld [vmem:[%s471 + $0x8] sm:$0xff]
      %v474 = vld [vmem:[%s471 + $0x18] sm:$0xff]
      %v475 = vld [vmem:[%s471 + $0x20] sm:$0xff]
      %v476 = vld [vmem:[%s471 + $0x30] sm:$0xff]
      %v477 = vld [vmem:[%s471 + $0x38] sm:$0xff]
      %v478 = vld [vmem:[%s471 + $0x48] sm:$0xff]
      %v479 = vld [vmem:[%s471 + $0x50] sm:$0xff]
      %v480 = vld [vmem:[%s471 + $0x60] sm:$0xff]
      %v481 = vld [vmem:[%s471 + $0x68] sm:$0xff]
      %v482 = vld [vmem:[%s471 + $0x78] sm:$0xff]
      %v483 = vld [vmem:[%s471 + $0x80] sm:$0xff]
      %v484 = vld [vmem:[%s471 + $0x90] sm:$0xff]
      %v485 = vld [vmem:[%s471 + $0x98] sm:$0xff]
      %v486 = vld [vmem:[%s471 + $0xa8] sm:$0xff]
      %v487 = vld [vmem:[%s471 + $0xb0] sm:$0xff]
      %s488 = scalar_lea.vmem %s1, 8
      %v489 = vld [vmem:[%s488] sm:$0xf]
      %v491 = vsel %vm235, %v472, 0
      %v494 = vsel %vm235, %v473, 0
      %v497 = vsel %vm235, %v474, 0
      %v500 = vsel %vm235, %v475, 0
      %v503 = vsel %vm235, %v476, 0
      %v506 = vsel %vm235, %v477, 0
      %v509 = vsel %vm235, %v478, 0
      %v512 = vsel %vm235, %v479, 0
      %v515 = vsel %vm235, %v480, 0
      %v518 = vsel %vm235, %v481, 0
      %v521 = vsel %vm235, %v482, 0
      %v524 = vsel %vm235, %v483, 0
      %v527 = vsel %vm235, %v484, 0
      %v530 = vsel %vm235, %v485, 0
      %v533 = vsel %vm235, %v486, 0
      %v536 = vsel %vm235, %v487, 0
      %v539 = vsel %vm284, %v489, 0
      %541 = vmatpush.msra.mxu0 0.0
      %542 = vmatpush.msra.mxu0 0.0
      %543 = vmatpush.msra.mxu0 0.0
      %544 = vmatpush.msra.mxu0 0.0
      %545 = vmatpush.msra.mxu0 0.0
      %546 = vmatpush.msra.mxu0 0.0
      %547 = vmatpush.msra.mxu0 0.0
      %548 = vmatpush.msra.mxu0 0.0
      %549 = vmatpush.msra.mxu0 0.0
      %550 = vmatpush.msra.mxu0 0.0
      %551 = vmatpush.msra.mxu0 0.0
      %552 = vmatpush.msra.mxu0 0.0
      %553 = vmatpush.msra.mxu0 0.0
      %554 = vmatpush.msra.mxu0 0.0
      %555 = vmatpush.msra.mxu0 0.0
      %556 = vmatpush.msra.mxu0 %v539
      %557 = vmatmul.f32.gmra.mxu0 %v491
      %v558 = vpop.f32.mrf.mxu0
      %v559 = vadd.f32 0.0, %v558
      %560 = vmatmul.f32.gmra.mxu0 %v494
      %v561 = vpop.f32.mrf.mxu0
      %v562 = vadd.f32 0.0, %v561
      %563 = vmatmul.f32.gmra.mxu0 %v497
      %v564 = vpop.f32.mrf.mxu0
      %v565 = vadd.f32 0.0, %v564
      %566 = vmatmul.f32.gmra.mxu0 %v500
      %v567 = vpop.f32.mrf.mxu0
      %v568 = vadd.f32 0.0, %v567
      %569 = vmatmul.f32.gmra.mxu0 %v503
      %v570 = vpop.f32.mrf.mxu0
      %v571 = vadd.f32 0.0, %v570
      %572 = vmatmul.f32.gmra.mxu0 %v506
      %v573 = vpop.f32.mrf.mxu0
      %v574 = vadd.f32 0.0, %v573
      %575 = vmatmul.f32.gmra.mxu0 %v509
      %v576 = vpop.f32.mrf.mxu0
      %v577 = vadd.f32 0.0, %v576
      %578 = vmatmul.f32.gmra.mxu0 %v512
      %v579 = vpop.f32.mrf.mxu0
      %v580 = vadd.f32 0.0, %v579
      %581 = vmatmul.f32.gmra.mxu0 %v515
      %v582 = vpop.f32.mrf.mxu0
      %v583 = vadd.f32 0.0, %v582
      %584 = vmatmul.f32.gmra.mxu0 %v518
      %v585 = vpop.f32.mrf.mxu0
      %v586 = vadd.f32 0.0, %v585
      %587 = vmatmul.f32.gmra.mxu0 %v521
      %v588 = vpop.f32.mrf.mxu0
      %v589 = vadd.f32 0.0, %v588
      %590 = vmatmul.f32.gmra.mxu0 %v524
      %v591 = vpop.f32.mrf.mxu0
      %v592 = vadd.f32 0.0, %v591
      %593 = vmatmul.f32.gmra.mxu0 %v527
      %v594 = vpop.f32.mrf.mxu0
      %v595 = vadd.f32 0.0, %v594
      %596 = vmatmul.f32.gmra.mxu0 %v530
      %v597 = vpop.f32.mrf.mxu0
      %v598 = vadd.f32 0.0, %v597
      %599 = vmatmul.f32.gmra.mxu0 %v533
      %v600 = vpop.f32.mrf.mxu0
      %v601 = vadd.f32 0.0, %v600
      %602 = vmatmul.f32.gmra.mxu0 %v536
      %v603 = vpop.f32.mrf.mxu0
      %v604 = vadd.f32 0.0, %v603
      %605 = vdwg.mxu0
      %v606 = vadd.f32 %v422, %v559
      %v607 = vadd.f32 %v425, %v562
      %v608 = vadd.f32 %v428, %v565
      %v609 = vadd.f32 %v431, %v568
      %v610 = vadd.f32 %v434, %v571
      %v611 = vadd.f32 %v437, %v574
      %v612 = vadd.f32 %v440, %v577
      %v613 = vadd.f32 %v443, %v580
      %v614 = vadd.f32 %v446, %v583
      %v615 = vadd.f32 %v449, %v586
      %v616 = vadd.f32 %v452, %v589
      %v617 = vadd.f32 %v455, %v592
      %v618 = vadd.f32 %v458, %v595
      %v619 = vadd.f32 %v461, %v598
      %v620 = vadd.f32 %v464, %v601
      %v621 = vadd.f32 %v467, %v604
      %v622 = vld [vmem:[%s471 + $0x1] sm:$0xff]
      %v623 = vld [vmem:[%s471 + $0x9] sm:$0xff]
      %v624 = vld [vmem:[%s471 + $0x19] sm:$0xff]
      %v625 = vld [vmem:[%s471 + $0x21] sm:$0xff]
      %v626 = vld [vmem:[%s471 + $0x31] sm:$0xff]
      %v627 = vld [vmem:[%s471 + $0x39] sm:$0xff]
      %v628 = vld [vmem:[%s471 + $0x49] sm:$0xff]
      %v629 = vld [vmem:[%s471 + $0x51] sm:$0xff]
      %v630 = vld [vmem:[%s471 + $0x61] sm:$0xff]
      %v631 = vld [vmem:[%s471 + $0x69] sm:$0xff]
      %v632 = vld [vmem:[%s471 + $0x79] sm:$0xff]
      %v633 = vld [vmem:[%s471 + $0x81] sm:$0xff]
      %v634 = vld [vmem:[%s471 + $0x91] sm:$0xff]
      %v635 = vld [vmem:[%s471 + $0x99] sm:$0xff]
      %v636 = vld [vmem:[%s471 + $0xa9] sm:$0xff]
      %v637 = vld [vmem:[%s471 + $0xb1] sm:$0xff]
      %s638 = scalar_lea.vmem %s1, 12
      %v639 = vld [vmem:[%s638] sm:$0xf]
      %v641 = vsel %vm235, %v622, 0
      %v644 = vsel %vm235, %v623, 0
      %v647 = vsel %vm235, %v624, 0
      %v650 = vsel %vm235, %v625, 0
      %v653 = vsel %vm235, %v626, 0
      %v656 = vsel %vm235, %v627, 0
      %v659 = vsel %vm235, %v628, 0
      %v662 = vsel %vm235, %v629, 0
      %v665 = vsel %vm235, %v630, 0
      %v668 = vsel %vm235, %v631, 0
      %v671 = vsel %vm235, %v632, 0
      %v674 = vsel %vm235, %v633, 0
      %v677 = vsel %vm235, %v634, 0
      %v680 = vsel %vm235, %v635, 0
      %v683 = vsel %vm235, %v636, 0
      %v686 = vsel %vm235, %v637, 0
      %v689 = vsel %vm284, %v639, 0
      %691 = vmatpush.msra.mxu0 0.0
      %692 = vmatpush.msra.mxu0 0.0
      %693 = vmatpush.msra.mxu0 0.0
      %694 = vmatpush.msra.mxu0 0.0
      %695 = vmatpush.msra.mxu0 0.0
      %696 = vmatpush.msra.mxu0 0.0
      %697 = vmatpush.msra.mxu0 0.0
      %698 = vmatpush.msra.mxu0 0.0
      %699 = vmatpush.msra.mxu0 0.0
      %700 = vmatpush.msra.mxu0 0.0
      %701 = vmatpush.msra.mxu0 0.0
      %702 = vmatpush.msra.mxu0 0.0
      %703 = vmatpush.msra.mxu0 0.0
      %704 = vmatpush.msra.mxu0 0.0
      %705 = vmatpush.msra.mxu0 0.0
      %706 = vmatpush.msra.mxu0 %v689
      %707 = vmatmul.f32.gmra.mxu0 %v641
      %v708 = vpop.f32.mrf.mxu0
      %v709 = vadd.f32 0.0, %v708
      %710 = vmatmul.f32.gmra.mxu0 %v644
      %v711 = vpop.f32.mrf.mxu0
      %v712 = vadd.f32 0.0, %v711
      %713 = vmatmul.f32.gmra.mxu0 %v647
      %v714 = vpop.f32.mrf.mxu0
      %v715 = vadd.f32 0.0, %v714
      %716 = vmatmul.f32.gmra.mxu0 %v650
      %v717 = vpop.f32.mrf.mxu0
      %v718 = vadd.f32 0.0, %v717
      %719 = vmatmul.f32.gmra.mxu0 %v653
      %v720 = vpop.f32.mrf.mxu0
      %v721 = vadd.f32 0.0, %v720
      %722 = vmatmul.f32.gmra.mxu0 %v656
      %v723 = vpop.f32.mrf.mxu0
      %v724 = vadd.f32 0.0, %v723
      %725 = vmatmul.f32.gmra.mxu0 %v659
      %v726 = vpop.f32.mrf.mxu0
      %v727 = vadd.f32 0.0, %v726
      %728 = vmatmul.f32.gmra.mxu0 %v662
      %v729 = vpop.f32.mrf.mxu0
      %v730 = vadd.f32 0.0, %v729
      %731 = vmatmul.f32.gmra.mxu0 %v665
      %v732 = vpop.f32.mrf.mxu0
      %v733 = vadd.f32 0.0, %v732
      %734 = vmatmul.f32.gmra.mxu0 %v668
      %v735 = vpop.f32.mrf.mxu0
      %v736 = vadd.f32 0.0, %v735
      %737 = vmatmul.f32.gmra.mxu0 %v671
      %v738 = vpop.f32.mrf.mxu0
      %v739 = vadd.f32 0.0, %v738
      %740 = vmatmul.f32.gmra.mxu0 %v674
      %v741 = vpop.f32.mrf.mxu0
      %v742 = vadd.f32 0.0, %v741
      %743 = vmatmul.f32.gmra.mxu0 %v677
      %v744 = vpop.f32.mrf.mxu0
      %v745 = vadd.f32 0.0, %v744
      %746 = vmatmul.f32.gmra.mxu0 %v680
      %v747 = vpop.f32.mrf.mxu0
      %v748 = vadd.f32 0.0, %v747
      %749 = vmatmul.f32.gmra.mxu0 %v683
      %v750 = vpop.f32.mrf.mxu0
      %v751 = vadd.f32 0.0, %v750
      %752 = vmatmul.f32.gmra.mxu0 %v686
      %v753 = vpop.f32.mrf.mxu0
      %v754 = vadd.f32 0.0, %v753
      %755 = vdwg.mxu0
      %v756 = vadd.f32 %v606, %v709
      %v757 = vadd.f32 %v607, %v712
      %v758 = vadd.f32 %v608, %v715
      %v759 = vadd.f32 %v609, %v718
      %v760 = vadd.f32 %v610, %v721
      %v761 = vadd.f32 %v611, %v724
      %v762 = vadd.f32 %v612, %v727
      %v763 = vadd.f32 %v613, %v730
      %v764 = vadd.f32 %v614, %v733
      %v765 = vadd.f32 %v615, %v736
      %v766 = vadd.f32 %v616, %v739
      %v767 = vadd.f32 %v617, %v742
      %v768 = vadd.f32 %v618, %v745
      %v769 = vadd.f32 %v619, %v748
      %v770 = vadd.f32 %v620, %v751
      %v771 = vadd.f32 %v621, %v754
      %v773 = vperm.slane %v197, 0
      %v775 = vadd.f32 %v756, %v773
      %v776 = vadd.f32 %v757, %v773
      %v777 = vadd.f32 %v758, %v773
      %v778 = vadd.f32 %v759, %v773
      %v779 = vadd.f32 %v760, %v773
      %v780 = vadd.f32 %v761, %v773
      %v781 = vadd.f32 %v762, %v773
      %v782 = vadd.f32 %v763, %v773
      %v783 = vadd.f32 %v764, %v773
      %v784 = vadd.f32 %v765, %v773
      %v785 = vadd.f32 %v766, %v773
      %v786 = vadd.f32 %v767, %v773
      %v787 = vadd.f32 %v768, %v773
      %v788 = vadd.f32 %v769, %v773
      %v789 = vadd.f32 %v770, %v773
      %v790 = vadd.f32 %v771, %v773
      %v791 = vadd.f32 %v775, 3.0
      %v792 = vadd.f32 %v776, 3.0
      %v793 = vadd.f32 %v777, 3.0
      %v794 = vadd.f32 %v778, 3.0
      %v795 = vadd.f32 %v779, 3.0
      %v796 = vadd.f32 %v780, 3.0
      %v797 = vadd.f32 %v781, 3.0
      %v798 = vadd.f32 %v782, 3.0
      %v799 = vadd.f32 %v783, 3.0
      %v800 = vadd.f32 %v784, 3.0
      %v801 = vadd.f32 %v785, 3.0
      %v802 = vadd.f32 %v786, 3.0
      %v803 = vadd.f32 %v787, 3.0
      %v804 = vadd.f32 %v788, 3.0
      %v805 = vadd.f32 %v789, 3.0
      %v806 = vadd.f32 %v790, 3.0
      %v807 = vmax.f32 %v791, 0.0
      %v808 = vmax.f32 %v792, 0.0
      %v809 = vmax.f32 %v793, 0.0
      %v810 = vmax.f32 %v794, 0.0
      %v811 = vmax.f32 %v795, 0.0
      %v812 = vmax.f32 %v796, 0.0
      %v813 = vmax.f32 %v797, 0.0
      %v814 = vmax.f32 %v798, 0.0
      %v815 = vmax.f32 %v799, 0.0
      %v816 = vmax.f32 %v800, 0.0
      %v817 = vmax.f32 %v801, 0.0
      %v818 = vmax.f32 %v802, 0.0
      %v819 = vmax.f32 %v803, 0.0
      %v820 = vmax.f32 %v804, 0.0
      %v821 = vmax.f32 %v805, 0.0
      %v822 = vmax.f32 %v806, 0.0
      %v823 = vmin.f32 %v807, 6.0
      %v824 = vmin.f32 %v808, 6.0
      %v825 = vmin.f32 %v809, 6.0
      %v826 = vmin.f32 %v810, 6.0
      %v827 = vmin.f32 %v811, 6.0
      %v828 = vmin.f32 %v812, 6.0
      %v829 = vmin.f32 %v813, 6.0
      %v830 = vmin.f32 %v814, 6.0
      %v831 = vmin.f32 %v815, 6.0
      %v832 = vmin.f32 %v816, 6.0
      %v833 = vmin.f32 %v817, 6.0
      %v834 = vmin.f32 %v818, 6.0
      %v835 = vmin.f32 %v819, 6.0
      %v836 = vmin.f32 %v820, 6.0
      %v837 = vmin.f32 %v821, 6.0
      %v838 = vmin.f32 %v822, 6.0
      %v839 = vmul.f32 %v775, %v823
      %v840 = vmul.f32 %v776, %v824
      %v841 = vmul.f32 %v777, %v825
      %v842 = vmul.f32 %v778, %v826
      %v843 = vmul.f32 %v779, %v827
      %v844 = vmul.f32 %v780, %v828
      %v845 = vmul.f32 %v781, %v829
      %v846 = vmul.f32 %v782, %v830
      %v847 = vmul.f32 %v783, %v831
      %v848 = vmul.f32 %v784, %v832
      %v849 = vmul.f32 %v785, %v833
      %v850 = vmul.f32 %v786, %v834
      %v851 = vmul.f32 %v787, %v835
      %v852 = vmul.f32 %v788, %v836
      %v853 = vmul.f32 %v789, %v837
      %v854 = vmul.f32 %v790, %v838
      %v855 = vmul.f32 %v839, 0.16666667
      %v856 = vmul.f32 %v840, 0.16666667
      %v857 = vmul.f32 %v841, 0.16666667
      %v858 = vmul.f32 %v842, 0.16666667
      %v859 = vmul.f32 %v843, 0.16666667
      %v860 = vmul.f32 %v844, 0.16666667
      %v861 = vmul.f32 %v845, 0.16666667
      %v862 = vmul.f32 %v846, 0.16666667
      %v863 = vmul.f32 %v847, 0.16666667
      %v864 = vmul.f32 %v848, 0.16666667
      %v865 = vmul.f32 %v849, 0.16666667
      %v866 = vmul.f32 %v850, 0.16666667
      %v867 = vmul.f32 %v851, 0.16666667
      %v868 = vmul.f32 %v852, 0.16666667
      %v869 = vmul.f32 %v853, 0.16666667
      %v870 = vmul.f32 %v854, 0.16666667
      %vm871 = vcmask 195584
      %872 = vst.msk [vmem:[%s194] sm:$0xff] %vm871, %v855
      %873 = vst.msk [vmem:[%s194 + $0x8] sm:$0xff] %vm871, %v856
      %874 = vst.msk [vmem:[%s194 + $0x40] sm:$0xff] %vm871, %v857
      %875 = vst.msk [vmem:[%s194 + $0x48] sm:$0xff] %vm871, %v858
      %876 = vst.msk [vmem:[%s194 + $0x80] sm:$0xff] %vm871, %v859
      %877 = vst.msk [vmem:[%s194 + $0x88] sm:$0xff] %vm871, %v860
      %878 = vst.msk [vmem:[%s194 + $0xc0] sm:$0xff] %vm871, %v861
      %879 = vst.msk [vmem:[%s194 + $0xc8] sm:$0xff] %vm871, %v862
      %880 = vst.msk [vmem:[%s194 + $0x100] sm:$0xff] %vm871, %v863
      %881 = vst.msk [vmem:[%s194 + $0x108] sm:$0xff] %vm871, %v864
      %882 = vst.msk [vmem:[%s194 + $0x140] sm:$0xff] %vm871, %v865
      %883 = vst.msk [vmem:[%s194 + $0x148] sm:$0xff] %vm871, %v866
      %884 = vst.msk [vmem:[%s194 + $0x180] sm:$0xff] %vm871, %v867
      %885 = vst.msk [vmem:[%s194 + $0x188] sm:$0xff] %vm871, %v868
      %886 = vst.msk [vmem:[%s194 + $0x1c0] sm:$0xff] %vm871, %v869
      %887 = vst.msk [vmem:[%s194 + $0x1c8] sm:$0xff] %vm871, %v870
      %v888 = vld [vmem:[%s199 + $0x1] sm:$0xff]
      %v889 = vld [vmem:[%s199 + $0x9] sm:$0xff]
      %v890 = vld [vmem:[%s199 + $0x19] sm:$0xff]
      %v891 = vld [vmem:[%s199 + $0x21] sm:$0xff]
      %v892 = vld [vmem:[%s199 + $0x31] sm:$0xff]
      %v893 = vld [vmem:[%s199 + $0x39] sm:$0xff]
      %v894 = vld [vmem:[%s199 + $0x49] sm:$0xff]
      %v895 = vld [vmem:[%s199 + $0x51] sm:$0xff]
      %v896 = vld [vmem:[%s199 + $0x61] sm:$0xff]
      %v897 = vld [vmem:[%s199 + $0x69] sm:$0xff]
      %v898 = vld [vmem:[%s199 + $0x79] sm:$0xff]
      %v899 = vld [vmem:[%s199 + $0x81] sm:$0xff]
      %v900 = vld [vmem:[%s199 + $0x91] sm:$0xff]
      %v901 = vld [vmem:[%s199 + $0x99] sm:$0xff]
      %v902 = vld [vmem:[%s199 + $0xa9] sm:$0xff]
      %v903 = vld [vmem:[%s199 + $0xb1] sm:$0xff]
      %s904 = scalar_lea.vmem %s1, 16
      %v905 = vld [vmem:[%s904] sm:$0xf]
      %v906 = vld [vmem:[%s199 + $0x2] sm:$0xff]
      %v907 = vld [vmem:[%s199 + $0xa] sm:$0xff]
      %v908 = vld [vmem:[%s199 + $0x1a] sm:$0xff]
      %v909 = vld [vmem:[%s199 + $0x22] sm:$0xff]
      %v910 = vld [vmem:[%s199 + $0x32] sm:$0xff]
      %v911 = vld [vmem:[%s199 + $0x3a] sm:$0xff]
      %v912 = vld [vmem:[%s199 + $0x4a] sm:$0xff]
      %v913 = vld [vmem:[%s199 + $0x52] sm:$0xff]
      %v914 = vld [vmem:[%s199 + $0x62] sm:$0xff]
      %v915 = vld [vmem:[%s199 + $0x6a] sm:$0xff]
      %v916 = vld [vmem:[%s199 + $0x7a] sm:$0xff]
      %v917 = vld [vmem:[%s199 + $0x82] sm:$0xff]
      %v918 = vld [vmem:[%s199 + $0x92] sm:$0xff]
      %v919 = vld [vmem:[%s199 + $0x9a] sm:$0xff]
      %v920 = vld [vmem:[%s199 + $0xaa] sm:$0xff]
      %v921 = vld [vmem:[%s199 + $0xb2] sm:$0xff]
      %s922 = scalar_lea.vmem %s1, 20
      %v923 = vld [vmem:[%s922] sm:$0xf]
      %v925 = vsel %vm235, %v906, 0
      %v928 = vsel %vm235, %v907, 0
      %v931 = vsel %vm235, %v908, 0
      %v934 = vsel %vm235, %v909, 0
      %v937 = vsel %vm235, %v910, 0
      %v940 = vsel %vm235, %v911, 0
      %v943 = vsel %vm235, %v912, 0
      %v946 = vsel %vm235, %v913, 0
      %v949 = vsel %vm235, %v914, 0
      %v952 = vsel %vm235, %v915, 0
      %v955 = vsel %vm235, %v916, 0
      %v958 = vsel %vm235, %v917, 0
      %v961 = vsel %vm235, %v918, 0
      %v964 = vsel %vm235, %v919, 0
      %v967 = vsel %vm235, %v920, 0
      %v970 = vsel %vm235, %v921, 0
      %v973 = vsel %vm284, %v923, 0
      %975 = vmatpush.msra.mxu0 0.0
      %976 = vmatpush.msra.mxu0 0.0
      %977 = vmatpush.msra.mxu0 0.0
      %978 = vmatpush.msra.mxu0 0.0
      %979 = vmatpush.msra.mxu0 0.0
      %980 = vmatpush.msra.mxu0 0.0
      %981 = vmatpush.msra.mxu0 0.0
      %982 = vmatpush.msra.mxu0 0.0
      %983 = vmatpush.msra.mxu0 0.0
      %984 = vmatpush.msra.mxu0 0.0
      %985 = vmatpush.msra.mxu0 0.0
      %986 = vmatpush.msra.mxu0 0.0
      %987 = vmatpush.msra.mxu0 0.0
      %988 = vmatpush.msra.mxu0 0.0
      %989 = vmatpush.msra.mxu0 0.0
      %990 = vmatpush.msra.mxu0 %v973
      %991 = vmatmul.f32.gmra.mxu0 %v925
      %v992 = vpop.f32.mrf.mxu0
      %v993 = vadd.f32 0.0, %v992
      %994 = vmatmul.f32.gmra.mxu0 %v928
      %v995 = vpop.f32.mrf.mxu0
      %v996 = vadd.f32 0.0, %v995
      %997 = vmatmul.f32.gmra.mxu0 %v931
      %v998 = vpop.f32.mrf.mxu0
      %v999 = vadd.f32 0.0, %v998
      %1000 = vmatmul.f32.gmra.mxu0 %v934
      %v1001 = vpop.f32.mrf.mxu0
      %v1002 = vadd.f32 0.0, %v1001
      %1003 = vmatmul.f32.gmra.mxu0 %v937
      %v1004 = vpop.f32.mrf.mxu0
      %v1005 = vadd.f32 0.0, %v1004
      %1006 = vmatmul.f32.gmra.mxu0 %v940
      %v1007 = vpop.f32.mrf.mxu0
      %v1008 = vadd.f32 0.0, %v1007
      %1009 = vmatmul.f32.gmra.mxu0 %v943
      %v1010 = vpop.f32.mrf.mxu0
      %v1011 = vadd.f32 0.0, %v1010
      %1012 = vmatmul.f32.gmra.mxu0 %v946
      %v1013 = vpop.f32.mrf.mxu0
      %v1014 = vadd.f32 0.0, %v1013
      %1015 = vmatmul.f32.gmra.mxu0 %v949
      %v1016 = vpop.f32.mrf.mxu0
      %v1017 = vadd.f32 0.0, %v1016
      %1018 = vmatmul.f32.gmra.mxu0 %v952
      %v1019 = vpop.f32.mrf.mxu0
      %v1020 = vadd.f32 0.0, %v1019
      %1021 = vmatmul.f32.gmra.mxu0 %v955
      %v1022 = vpop.f32.mrf.mxu0
      %v1023 = vadd.f32 0.0, %v1022
      %1024 = vmatmul.f32.gmra.mxu0 %v958
      %v1025 = vpop.f32.mrf.mxu0
      %v1026 = vadd.f32 0.0, %v1025
      %1027 = vmatmul.f32.gmra.mxu0 %v961
      %v1028 = vpop.f32.mrf.mxu0
      %v1029 = vadd.f32 0.0, %v1028
      %1030 = vmatmul.f32.gmra.mxu0 %v964
      %v1031 = vpop.f32.mrf.mxu0
      %v1032 = vadd.f32 0.0, %v1031
      %1033 = vmatmul.f32.gmra.mxu0 %v967
      %v1034 = vpop.f32.mrf.mxu0
      %v1035 = vadd.f32 0.0, %v1034
      %1036 = vmatmul.f32.gmra.mxu0 %v970
      %v1037 = vpop.f32.mrf.mxu0
      %v1038 = vadd.f32 0.0, %v1037
      %1039 = vdwg.mxu0
      %v1041 = vsel %vm235, %v888, 0
      %v1044 = vsel %vm235, %v889, 0
      %v1047 = vsel %vm235, %v890, 0
      %v1050 = vsel %vm235, %v891, 0
      %v1053 = vsel %vm235, %v892, 0
      %v1056 = vsel %vm235, %v893, 0
      %v1059 = vsel %vm235, %v894, 0
      %v1062 = vsel %vm235, %v895, 0
      %v1065 = vsel %vm235, %v896, 0
      %v1068 = vsel %vm235, %v897, 0
      %v1071 = vsel %vm235, %v898, 0
      %v1074 = vsel %vm235, %v899, 0
      %v1077 = vsel %vm235, %v900, 0
      %v1080 = vsel %vm235, %v901, 0
      %v1083 = vsel %vm235, %v902, 0
      %v1086 = vsel %vm235, %v903, 0
      %v1089 = vsel %vm284, %v905, 0
      %1091 = vmatpush.msra.mxu0 0.0
      %1092 = vmatpush.msra.mxu0 0.0
      %1093 = vmatpush.msra.mxu0 0.0
      %1094 = vmatpush.msra.mxu0 0.0
      %1095 = vmatpush.msra.mxu0 0.0
      %1096 = vmatpush.msra.mxu0 0.0
      %1097 = vmatpush.msra.mxu0 0.0
      %1098 = vmatpush.msra.mxu0 0.0
      %1099 = vmatpush.msra.mxu0 0.0
      %1100 = vmatpush.msra.mxu0 0.0
      %1101 = vmatpush.msra.mxu0 0.0
      %1102 = vmatpush.msra.mxu0 0.0
      %1103 = vmatpush.msra.mxu0 0.0
      %1104 = vmatpush.msra.mxu0 0.0
      %1105 = vmatpush.msra.mxu0 0.0
      %1106 = vmatpush.msra.mxu0 %v1089
      %1107 = vmatmul.f32.gmra.mxu0 %v1041
      %v1108 = vpop.f32.mrf.mxu0
      %v1109 = vadd.f32 %v993, %v1108
      %1110 = vmatmul.f32.gmra.mxu0 %v1044
      %v1111 = vpop.f32.mrf.mxu0
      %v1112 = vadd.f32 %v996, %v1111
      %1113 = vmatmul.f32.gmra.mxu0 %v1047
      %v1114 = vpop.f32.mrf.mxu0
      %v1115 = vadd.f32 %v999, %v1114
      %1116 = vmatmul.f32.gmra.mxu0 %v1050
      %v1117 = vpop.f32.mrf.mxu0
      %v1118 = vadd.f32 %v1002, %v1117
      %1119 = vmatmul.f32.gmra.mxu0 %v1053
      %v1120 = vpop.f32.mrf.mxu0
      %v1121 = vadd.f32 %v1005, %v1120
      %1122 = vmatmul.f32.gmra.mxu0 %v1056
      %v1123 = vpop.f32.mrf.mxu0
      %v1124 = vadd.f32 %v1008, %v1123
      %1125 = vmatmul.f32.gmra.mxu0 %v1059
      %v1126 = vpop.f32.mrf.mxu0
      %v1127 = vadd.f32 %v1011, %v1126
      %1128 = vmatmul.f32.gmra.mxu0 %v1062
      %v1129 = vpop.f32.mrf.mxu0
      %v1130 = vadd.f32 %v1014, %v1129
      %1131 = vmatmul.f32.gmra.mxu0 %v1065
      %v1132 = vpop.f32.mrf.mxu0
      %v1133 = vadd.f32 %v1017, %v1132
      %1134 = vmatmul.f32.gmra.mxu0 %v1068
      %v1135 = vpop.f32.mrf.mxu0
      %v1136 = vadd.f32 %v1020, %v1135
      %1137 = vmatmul.f32.gmra.mxu0 %v1071
      %v1138 = vpop.f32.mrf.mxu0
      %v1139 = vadd.f32 %v1023, %v1138
      %1140 = vmatmul.f32.gmra.mxu0 %v1074
      %v1141 = vpop.f32.mrf.mxu0
      %v1142 = vadd.f32 %v1026, %v1141
      %1143 = vmatmul.f32.gmra.mxu0 %v1077
      %v1144 = vpop.f32.mrf.mxu0
      %v1145 = vadd.f32 %v1029, %v1144
      %1146 = vmatmul.f32.gmra.mxu0 %v1080
      %v1147 = vpop.f32.mrf.mxu0
      %v1148 = vadd.f32 %v1032, %v1147
      %1149 = vmatmul.f32.gmra.mxu0 %v1083
      %v1150 = vpop.f32.mrf.mxu0
      %v1151 = vadd.f32 %v1035, %v1150
      %1152 = vmatmul.f32.gmra.mxu0 %v1086
      %v1153 = vpop.f32.mrf.mxu0
      %v1154 = vadd.f32 %v1038, %v1153
      %1155 = vdwg.mxu0
      %v1156 = vld [vmem:[%s471 + $0x1] sm:$0xff]
      %v1157 = vld [vmem:[%s471 + $0x9] sm:$0xff]
      %v1158 = vld [vmem:[%s471 + $0x19] sm:$0xff]
      %v1159 = vld [vmem:[%s471 + $0x21] sm:$0xff]
      %v1160 = vld [vmem:[%s471 + $0x31] sm:$0xff]
      %v1161 = vld [vmem:[%s471 + $0x39] sm:$0xff]
      %v1162 = vld [vmem:[%s471 + $0x49] sm:$0xff]
      %v1163 = vld [vmem:[%s471 + $0x51] sm:$0xff]
      %v1164 = vld [vmem:[%s471 + $0x61] sm:$0xff]
      %v1165 = vld [vmem:[%s471 + $0x69] sm:$0xff]
      %v1166 = vld [vmem:[%s471 + $0x79] sm:$0xff]
      %v1167 = vld [vmem:[%s471 + $0x81] sm:$0xff]
      %v1168 = vld [vmem:[%s471 + $0x91] sm:$0xff]
      %v1169 = vld [vmem:[%s471 + $0x99] sm:$0xff]
      %v1170 = vld [vmem:[%s471 + $0xa9] sm:$0xff]
      %v1171 = vld [vmem:[%s471 + $0xb1] sm:$0xff]
      %s1172 = scalar_lea.vmem %s1, 24
      %v1173 = vld [vmem:[%s1172] sm:$0xf]
      %v1175 = vsel %vm235, %v1156, 0
      %v1178 = vsel %vm235, %v1157, 0
      %v1181 = vsel %vm235, %v1158, 0
      %v1184 = vsel %vm235, %v1159, 0
      %v1187 = vsel %vm235, %v1160, 0
      %v1190 = vsel %vm235, %v1161, 0
      %v1193 = vsel %vm235, %v1162, 0
      %v1196 = vsel %vm235, %v1163, 0
      %v1199 = vsel %vm235, %v1164, 0
      %v1202 = vsel %vm235, %v1165, 0
      %v1205 = vsel %vm235, %v1166, 0
      %v1208 = vsel %vm235, %v1167, 0
      %v1211 = vsel %vm235, %v1168, 0
      %v1214 = vsel %vm235, %v1169, 0
      %v1217 = vsel %vm235, %v1170, 0
      %v1220 = vsel %vm235, %v1171, 0
      %v1223 = vsel %vm284, %v1173, 0
      %1225 = vmatpush.msra.mxu0 0.0
      %1226 = vmatpush.msra.mxu0 0.0
      %1227 = vmatpush.msra.mxu0 0.0
      %1228 = vmatpush.msra.mxu0 0.0
      %1229 = vmatpush.msra.mxu0 0.0
      %1230 = vmatpush.msra.mxu0 0.0
      %1231 = vmatpush.msra.mxu0 0.0
      %1232 = vmatpush.msra.mxu0 0.0
      %1233 = vmatpush.msra.mxu0 0.0
      %1234 = vmatpush.msra.mxu0 0.0
      %1235 = vmatpush.msra.mxu0 0.0
      %1236 = vmatpush.msra.mxu0 0.0
      %1237 = vmatpush.msra.mxu0 0.0
      %1238 = vmatpush.msra.mxu0 0.0
      %1239 = vmatpush.msra.mxu0 0.0
      %1240 = vmatpush.msra.mxu0 %v1223
      %1241 = vmatmul.f32.gmra.mxu0 %v1175
      %v1242 = vpop.f32.mrf.mxu0
      %v1243 = vadd.f32 0.0, %v1242
      %1244 = vmatmul.f32.gmra.mxu0 %v1178
      %v1245 = vpop.f32.mrf.mxu0
      %v1246 = vadd.f32 0.0, %v1245
      %1247 = vmatmul.f32.gmra.mxu0 %v1181
      %v1248 = vpop.f32.mrf.mxu0
      %v1249 = vadd.f32 0.0, %v1248
      %1250 = vmatmul.f32.gmra.mxu0 %v1184
      %v1251 = vpop.f32.mrf.mxu0
      %v1252 = vadd.f32 0.0, %v1251
      %1253 = vmatmul.f32.gmra.mxu0 %v1187
      %v1254 = vpop.f32.mrf.mxu0
      %v1255 = vadd.f32 0.0, %v1254
      %1256 = vmatmul.f32.gmra.mxu0 %v1190
      %v1257 = vpop.f32.mrf.mxu0
      %v1258 = vadd.f32 0.0, %v1257
      %1259 = vmatmul.f32.gmra.mxu0 %v1193
      %v1260 = vpop.f32.mrf.mxu0
      %v1261 = vadd.f32 0.0, %v1260
      %1262 = vmatmul.f32.gmra.mxu0 %v1196
      %v1263 = vpop.f32.mrf.mxu0
      %v1264 = vadd.f32 0.0, %v1263
      %1265 = vmatmul.f32.gmra.mxu0 %v1199
      %v1266 = vpop.f32.mrf.mxu0
      %v1267 = vadd.f32 0.0, %v1266
      %1268 = vmatmul.f32.gmra.mxu0 %v1202
      %v1269 = vpop.f32.mrf.mxu0
      %v1270 = vadd.f32 0.0, %v1269
      %1271 = vmatmul.f32.gmra.mxu0 %v1205
      %v1272 = vpop.f32.mrf.mxu0
      %v1273 = vadd.f32 0.0, %v1272
      %1274 = vmatmul.f32.gmra.mxu0 %v1208
      %v1275 = vpop.f32.mrf.mxu0
      %v1276 = vadd.f32 0.0, %v1275
      %1277 = vmatmul.f32.gmra.mxu0 %v1211
      %v1278 = vpop.f32.mrf.mxu0
      %v1279 = vadd.f32 0.0, %v1278
      %1280 = vmatmul.f32.gmra.mxu0 %v1214
      %v1281 = vpop.f32.mrf.mxu0
      %v1282 = vadd.f32 0.0, %v1281
      %1283 = vmatmul.f32.gmra.mxu0 %v1217
      %v1284 = vpop.f32.mrf.mxu0
      %v1285 = vadd.f32 0.0, %v1284
      %1286 = vmatmul.f32.gmra.mxu0 %v1220
      %v1287 = vpop.f32.mrf.mxu0
      %v1288 = vadd.f32 0.0, %v1287
      %1289 = vdwg.mxu0
      %v1290 = vadd.f32 %v1109, %v1243
      %v1291 = vadd.f32 %v1112, %v1246
      %v1292 = vadd.f32 %v1115, %v1249
      %v1293 = vadd.f32 %v1118, %v1252
      %v1294 = vadd.f32 %v1121, %v1255
      %v1295 = vadd.f32 %v1124, %v1258
      %v1296 = vadd.f32 %v1127, %v1261
      %v1297 = vadd.f32 %v1130, %v1264
      %v1298 = vadd.f32 %v1133, %v1267
      %v1299 = vadd.f32 %v1136, %v1270
      %v1300 = vadd.f32 %v1139, %v1273
      %v1301 = vadd.f32 %v1142, %v1276
      %v1302 = vadd.f32 %v1145, %v1279
      %v1303 = vadd.f32 %v1148, %v1282
      %v1304 = vadd.f32 %v1151, %v1285
      %v1305 = vadd.f32 %v1154, %v1288
      %v1306 = vld [vmem:[%s471 + $0x2] sm:$0xff]
      %v1307 = vld [vmem:[%s471 + $0xa] sm:$0xff]
      %v1308 = vld [vmem:[%s471 + $0x1a] sm:$0xff]
      %v1309 = vld [vmem:[%s471 + $0x22] sm:$0xff]
      %v1310 = vld [vmem:[%s471 + $0x32] sm:$0xff]
      %v1311 = vld [vmem:[%s471 + $0x3a] sm:$0xff]
      %v1312 = vld [vmem:[%s471 + $0x4a] sm:$0xff]
      %v1313 = vld [vmem:[%s471 + $0x52] sm:$0xff]
      %v1314 = vld [vmem:[%s471 + $0x62] sm:$0xff]
      %v1315 = vld [vmem:[%s471 + $0x6a] sm:$0xff]
      %v1316 = vld [vmem:[%s471 + $0x7a] sm:$0xff]
      %v1317 = vld [vmem:[%s471 + $0x82] sm:$0xff]
      %v1318 = vld [vmem:[%s471 + $0x92] sm:$0xff]
      %v1319 = vld [vmem:[%s471 + $0x9a] sm:$0xff]
      %v1320 = vld [vmem:[%s471 + $0xaa] sm:$0xff]
      %v1321 = vld [vmem:[%s471 + $0xb2] sm:$0xff]
      %s1322 = scalar_lea.vmem %s1, 28
      %v1323 = vld [vmem:[%s1322] sm:$0xf]
      %v1325 = vsel %vm235, %v1306, 0
      %v1328 = vsel %vm235, %v1307, 0
      %v1331 = vsel %vm235, %v1308, 0
      %v1334 = vsel %vm235, %v1309, 0
      %v1337 = vsel %vm235, %v1310, 0
      %v1340 = vsel %vm235, %v1311, 0
      %v1343 = vsel %vm235, %v1312, 0
      %v1346 = vsel %vm235, %v1313, 0
      %v1349 = vsel %vm235, %v1314, 0
      %v1352 = vsel %vm235, %v1315, 0
      %v1355 = vsel %vm235, %v1316, 0
      %v1358 = vsel %vm235, %v1317, 0
      %v1361 = vsel %vm235, %v1318, 0
      %v1364 = vsel %vm235, %v1319, 0
      %v1367 = vsel %vm235, %v1320, 0
      %v1370 = vsel %vm235, %v1321, 0
      %v1373 = vsel %vm284, %v1323, 0
      %1375 = vmatpush.msra.mxu0 0.0
      %1376 = vmatpush.msra.mxu0 0.0
      %1377 = vmatpush.msra.mxu0 0.0
      %1378 = vmatpush.msra.mxu0 0.0
      %1379 = vmatpush.msra.mxu0 0.0
      %1380 = vmatpush.msra.mxu0 0.0
      %1381 = vmatpush.msra.mxu0 0.0
      %1382 = vmatpush.msra.mxu0 0.0
      %1383 = vmatpush.msra.mxu0 0.0
      %1384 = vmatpush.msra.mxu0 0.0
      %1385 = vmatpush.msra.mxu0 0.0
      %1386 = vmatpush.msra.mxu0 0.0
      %1387 = vmatpush.msra.mxu0 0.0
      %1388 = vmatpush.msra.mxu0 0.0
      %1389 = vmatpush.msra.mxu0 0.0
      %1390 = vmatpush.msra.mxu0 %v1373
      %1391 = vmatmul.f32.gmra.mxu0 %v1325
      %v1392 = vpop.f32.mrf.mxu0
      %v1393 = vadd.f32 0.0, %v1392
      %1394 = vmatmul.f32.gmra.mxu0 %v1328
      %v1395 = vpop.f32.mrf.mxu0
      %v1396 = vadd.f32 0.0, %v1395
      %1397 = vmatmul.f32.gmra.mxu0 %v1331
      %v1398 = vpop.f32.mrf.mxu0
      %v1399 = vadd.f32 0.0, %v1398
      %1400 = vmatmul.f32.gmra.mxu0 %v1334
      %v1401 = vpop.f32.mrf.mxu0
      %v1402 = vadd.f32 0.0, %v1401
      %1403 = vmatmul.f32.gmra.mxu0 %v1337
      %v1404 = vpop.f32.mrf.mxu0
      %v1405 = vadd.f32 0.0, %v1404
      %1406 = vmatmul.f32.gmra.mxu0 %v1340
      %v1407 = vpop.f32.mrf.mxu0
      %v1408 = vadd.f32 0.0, %v1407
      %1409 = vmatmul.f32.gmra.mxu0 %v1343
      %v1410 = vpop.f32.mrf.mxu0
      %v1411 = vadd.f32 0.0, %v1410
      %1412 = vmatmul.f32.gmra.mxu0 %v1346
      %v1413 = vpop.f32.mrf.mxu0
      %v1414 = vadd.f32 0.0, %v1413
      %1415 = vmatmul.f32.gmra.mxu0 %v1349
      %v1416 = vpop.f32.mrf.mxu0
      %v1417 = vadd.f32 0.0, %v1416
      %1418 = vmatmul.f32.gmra.mxu0 %v1352
      %v1419 = vpop.f32.mrf.mxu0
      %v1420 = vadd.f32 0.0, %v1419
      %1421 = vmatmul.f32.gmra.mxu0 %v1355
      %v1422 = vpop.f32.mrf.mxu0
      %v1423 = vadd.f32 0.0, %v1422
      %1424 = vmatmul.f32.gmra.mxu0 %v1358
      %v1425 = vpop.f32.mrf.mxu0
      %v1426 = vadd.f32 0.0, %v1425
      %1427 = vmatmul.f32.gmra.mxu0 %v1361
      %v1428 = vpop.f32.mrf.mxu0
      %v1429 = vadd.f32 0.0, %v1428
      %1430 = vmatmul.f32.gmra.mxu0 %v1364
      %v1431 = vpop.f32.mrf.mxu0
      %v1432 = vadd.f32 0.0, %v1431
      %1433 = vmatmul.f32.gmra.mxu0 %v1367
      %v1434 = vpop.f32.mrf.mxu0
      %v1435 = vadd.f32 0.0, %v1434
      %1436 = vmatmul.f32.gmra.mxu0 %v1370
      %v1437 = vpop.f32.mrf.mxu0
      %v1438 = vadd.f32 0.0, %v1437
      %1439 = vdwg.mxu0
      %v1440 = vadd.f32 %v1290, %v1393
      %v1441 = vadd.f32 %v1291, %v1396
      %v1442 = vadd.f32 %v1292, %v1399
      %v1443 = vadd.f32 %v1293, %v1402
      %v1444 = vadd.f32 %v1294, %v1405
      %v1445 = vadd.f32 %v1295, %v1408
      %v1446 = vadd.f32 %v1296, %v1411
      %v1447 = vadd.f32 %v1297, %v1414
      %v1448 = vadd.f32 %v1298, %v1417
      %v1449 = vadd.f32 %v1299, %v1420
      %v1450 = vadd.f32 %v1300, %v1423
      %v1451 = vadd.f32 %v1301, %v1426
      %v1452 = vadd.f32 %v1302, %v1429
      %v1453 = vadd.f32 %v1303, %v1432
      %v1454 = vadd.f32 %v1304, %v1435
      %v1455 = vadd.f32 %v1305, %v1438
      %v1456 = vadd.f32 %v1440, %v773
      %v1457 = vadd.f32 %v1441, %v773
      %v1458 = vadd.f32 %v1442, %v773
      %v1459 = vadd.f32 %v1443, %v773
      %v1460 = vadd.f32 %v1444, %v773
      %v1461 = vadd.f32 %v1445, %v773
      %v1462 = vadd.f32 %v1446, %v773
      %v1463 = vadd.f32 %v1447, %v773
      %v1464 = vadd.f32 %v1448, %v773
      %v1465 = vadd.f32 %v1449, %v773
      %v1466 = vadd.f32 %v1450, %v773
      %v1467 = vadd.f32 %v1451, %v773
      %v1468 = vadd.f32 %v1452, %v773
      %v1469 = vadd.f32 %v1453, %v773
      %v1470 = vadd.f32 %v1454, %v773
      %v1471 = vadd.f32 %v1455, %v773
      %v1472 = vadd.f32 %v1456, 3.0
      %v1473 = vadd.f32 %v1457, 3.0
      %v1474 = vadd.f32 %v1458, 3.0
      %v1475 = vadd.f32 %v1459, 3.0
      %v1476 = vadd.f32 %v1460, 3.0
      %v1477 = vadd.f32 %v1461, 3.0
      %v1478 = vadd.f32 %v1462, 3.0
      %v1479 = vadd.f32 %v1463, 3.0
      %v1480 = vadd.f32 %v1464, 3.0
      %v1481 = vadd.f32 %v1465, 3.0
      %v1482 = vadd.f32 %v1466, 3.0
      %v1483 = vadd.f32 %v1467, 3.0
      %v1484 = vadd.f32 %v1468, 3.0
      %v1485 = vadd.f32 %v1469, 3.0
      %v1486 = vadd.f32 %v1470, 3.0
      %v1487 = vadd.f32 %v1471, 3.0
      %v1488 = vmax.f32 %v1472, 0.0
      %v1489 = vmax.f32 %v1473, 0.0
      %v1490 = vmax.f32 %v1474, 0.0
      %v1491 = vmax.f32 %v1475, 0.0
      %v1492 = vmax.f32 %v1476, 0.0
      %v1493 = vmax.f32 %v1477, 0.0
      %v1494 = vmax.f32 %v1478, 0.0
      %v1495 = vmax.f32 %v1479, 0.0
      %v1496 = vmax.f32 %v1480, 0.0
      %v1497 = vmax.f32 %v1481, 0.0
      %v1498 = vmax.f32 %v1482, 0.0
      %v1499 = vmax.f32 %v1483, 0.0
      %v1500 = vmax.f32 %v1484, 0.0
      %v1501 = vmax.f32 %v1485, 0.0
      %v1502 = vmax.f32 %v1486, 0.0
      %v1503 = vmax.f32 %v1487, 0.0
      %v1504 = vmin.f32 %v1488, 6.0
      %v1505 = vmin.f32 %v1489, 6.0
      %v1506 = vmin.f32 %v1490, 6.0
      %v1507 = vmin.f32 %v1491, 6.0
      %v1508 = vmin.f32 %v1492, 6.0
      %v1509 = vmin.f32 %v1493, 6.0
      %v1510 = vmin.f32 %v1494, 6.0
      %v1511 = vmin.f32 %v1495, 6.0
      %v1512 = vmin.f32 %v1496, 6.0
      %v1513 = vmin.f32 %v1497, 6.0
      %v1514 = vmin.f32 %v1498, 6.0
      %v1515 = vmin.f32 %v1499, 6.0
      %v1516 = vmin.f32 %v1500, 6.0
      %v1517 = vmin.f32 %v1501, 6.0
      %v1518 = vmin.f32 %v1502, 6.0
      %v1519 = vmin.f32 %v1503, 6.0
      %v1520 = vmul.f32 %v1456, %v1504
      %v1521 = vmul.f32 %v1457, %v1505
      %v1522 = vmul.f32 %v1458, %v1506
      %v1523 = vmul.f32 %v1459, %v1507
      %v1524 = vmul.f32 %v1460, %v1508
      %v1525 = vmul.f32 %v1461, %v1509
      %v1526 = vmul.f32 %v1462, %v1510
      %v1527 = vmul.f32 %v1463, %v1511
      %v1528 = vmul.f32 %v1464, %v1512
      %v1529 = vmul.f32 %v1465, %v1513
      %v1530 = vmul.f32 %v1466, %v1514
      %v1531 = vmul.f32 %v1467, %v1515
      %v1532 = vmul.f32 %v1468, %v1516
      %v1533 = vmul.f32 %v1469, %v1517
      %v1534 = vmul.f32 %v1470, %v1518
      %v1535 = vmul.f32 %v1471, %v1519
      %v1536 = vmul.f32 %v1520, 0.16666667
      %v1537 = vmul.f32 %v1521, 0.16666667
      %v1538 = vmul.f32 %v1522, 0.16666667
      %v1539 = vmul.f32 %v1523, 0.16666667
      %v1540 = vmul.f32 %v1524, 0.16666667
      %v1541 = vmul.f32 %v1525, 0.16666667
      %v1542 = vmul.f32 %v1526, 0.16666667
      %v1543 = vmul.f32 %v1527, 0.16666667
      %v1544 = vmul.f32 %v1528, 0.16666667
      %v1545 = vmul.f32 %v1529, 0.16666667
      %v1546 = vmul.f32 %v1530, 0.16666667
      %v1547 = vmul.f32 %v1531, 0.16666667
      %v1548 = vmul.f32 %v1532, 0.16666667
      %v1549 = vmul.f32 %v1533, 0.16666667
      %v1550 = vmul.f32 %v1534, 0.16666667
      %v1551 = vmul.f32 %v1535, 0.16666667
      %s1552 = scalar_lea.vmem %s194, 16
      %1553 = vst.msk [vmem:[%s1552] sm:$0xff] %vm871, %v1536
      %1554 = vst.msk [vmem:[%s1552 + $0x8] sm:$0xff] %vm871, %v1537
      %1555 = vst.msk [vmem:[%s1552 + $0x40] sm:$0xff] %vm871, %v1538
      %1556 = vst.msk [vmem:[%s1552 + $0x48] sm:$0xff] %vm871, %v1539
      %1557 = vst.msk [vmem:[%s1552 + $0x80] sm:$0xff] %vm871, %v1540
      %1558 = vst.msk [vmem:[%s1552 + $0x88] sm:$0xff] %vm871, %v1541
      %1559 = vst.msk [vmem:[%s1552 + $0xc0] sm:$0xff] %vm871, %v1542
      %1560 = vst.msk [vmem:[%s1552 + $0xc8] sm:$0xff] %vm871, %v1543
      %1561 = vst.msk [vmem:[%s1552 + $0x100] sm:$0xff] %vm871, %v1544
      %1562 = vst.msk [vmem:[%s1552 + $0x108] sm:$0xff] %vm871, %v1545
      %1563 = vst.msk [vmem:[%s1552 + $0x140] sm:$0xff] %vm871, %v1546
      %1564 = vst.msk [vmem:[%s1552 + $0x148] sm:$0xff] %vm871, %v1547
      %1565 = vst.msk [vmem:[%s1552 + $0x180] sm:$0xff] %vm871, %v1548
      %1566 = vst.msk [vmem:[%s1552 + $0x188] sm:$0xff] %vm871, %v1549
      %1567 = vst.msk [vmem:[%s1552 + $0x1c0] sm:$0xff] %vm871, %v1550
      %1568 = vst.msk [vmem:[%s1552 + $0x1c8] sm:$0xff] %vm871, %v1551
      %v1569 = vld [vmem:[%s471] sm:$0xff]
      %v1570 = vld [vmem:[%s471 + $0x8] sm:$0xff]
      %v1571 = vld [vmem:[%s471 + $0x18] sm:$0xff]
      %v1572 = vld [vmem:[%s471 + $0x20] sm:$0xff]
      %v1573 = vld [vmem:[%s471 + $0x30] sm:$0xff]
      %v1574 = vld [vmem:[%s471 + $0x38] sm:$0xff]
      %v1575 = vld [vmem:[%s471 + $0x48] sm:$0xff]
      %v1576 = vld [vmem:[%s471 + $0x50] sm:$0xff]
      %v1577 = vld [vmem:[%s471 + $0x60] sm:$0xff]
      %v1578 = vld [vmem:[%s471 + $0x68] sm:$0xff]
      %v1579 = vld [vmem:[%s471 + $0x78] sm:$0xff]
      %v1580 = vld [vmem:[%s471 + $0x80] sm:$0xff]
      %v1581 = vld [vmem:[%s471 + $0x90] sm:$0xff]
      %v1582 = vld [vmem:[%s471 + $0x98] sm:$0xff]
      %v1583 = vld [vmem:[%s471 + $0xa8] sm:$0xff]
      %v1584 = vld [vmem:[%s471 + $0xb0] sm:$0xff]
      %s1585 = scalar_lea.vmem %s1, 32
      %v1586 = vld [vmem:[%s1585] sm:$0xf]
      %v1587 = vld [vmem:[%s471 + $0x1] sm:$0xff]
      %v1588 = vld [vmem:[%s471 + $0x9] sm:$0xff]
      %v1589 = vld [vmem:[%s471 + $0x19] sm:$0xff]
      %v1590 = vld [vmem:[%s471 + $0x21] sm:$0xff]
      %v1591 = vld [vmem:[%s471 + $0x31] sm:$0xff]
      %v1592 = vld [vmem:[%s471 + $0x39] sm:$0xff]
      %v1593 = vld [vmem:[%s471 + $0x49] sm:$0xff]
      %v1594 = vld [vmem:[%s471 + $0x51] sm:$0xff]
      %v1595 = vld [vmem:[%s471 + $0x61] sm:$0xff]
      %v1596 = vld [vmem:[%s471 + $0x69] sm:$0xff]
      %v1597 = vld [vmem:[%s471 + $0x79] sm:$0xff]
      %v1598 = vld [vmem:[%s471 + $0x81] sm:$0xff]
      %v1599 = vld [vmem:[%s471 + $0x91] sm:$0xff]
      %v1600 = vld [vmem:[%s471 + $0x99] sm:$0xff]
      %v1601 = vld [vmem:[%s471 + $0xa9] sm:$0xff]
      %v1602 = vld [vmem:[%s471 + $0xb1] sm:$0xff]
      %s1603 = scalar_lea.vmem %s1, 36
      %v1604 = vld [vmem:[%s1603] sm:$0xf]
      %v1606 = vsel %vm235, %v1587, 0
      %v1609 = vsel %vm235, %v1588, 0
      %v1612 = vsel %vm235, %v1589, 0
      %v1615 = vsel %vm235, %v1590, 0
      %v1618 = vsel %vm235, %v1591, 0
      %v1621 = vsel %vm235, %v1592, 0
      %v1624 = vsel %vm235, %v1593, 0
      %v1627 = vsel %vm235, %v1594, 0
      %v1630 = vsel %vm235, %v1595, 0
      %v1633 = vsel %vm235, %v1596, 0
      %v1636 = vsel %vm235, %v1597, 0
      %v1639 = vsel %vm235, %v1598, 0
      %v1642 = vsel %vm235, %v1599, 0
      %v1645 = vsel %vm235, %v1600, 0
      %v1648 = vsel %vm235, %v1601, 0
      %v1651 = vsel %vm235, %v1602, 0
      %v1654 = vsel %vm284, %v1604, 0
      %1656 = vmatpush.msra.mxu0 0.0
      %1657 = vmatpush.msra.mxu0 0.0
      %1658 = vmatpush.msra.mxu0 0.0
      %1659 = vmatpush.msra.mxu0 0.0
      %1660 = vmatpush.msra.mxu0 0.0
      %1661 = vmatpush.msra.mxu0 0.0
      %1662 = vmatpush.msra.mxu0 0.0
      %1663 = vmatpush.msra.mxu0 0.0
      %1664 = vmatpush.msra.mxu0 0.0
      %1665 = vmatpush.msra.mxu0 0.0
      %1666 = vmatpush.msra.mxu0 0.0
      %1667 = vmatpush.msra.mxu0 0.0
      %1668 = vmatpush.msra.mxu0 0.0
      %1669 = vmatpush.msra.mxu0 0.0
      %1670 = vmatpush.msra.mxu0 0.0
      %1671 = vmatpush.msra.mxu0 %v1654
      %1672 = vmatmul.f32.gmra.mxu0 %v1606
      %v1673 = vpop.f32.mrf.mxu0
      %v1674 = vadd.f32 0.0, %v1673
      %1675 = vmatmul.f32.gmra.mxu0 %v1609
      %v1676 = vpop.f32.mrf.mxu0
      %v1677 = vadd.f32 0.0, %v1676
      %1678 = vmatmul.f32.gmra.mxu0 %v1612
      %v1679 = vpop.f32.mrf.mxu0
      %v1680 = vadd.f32 0.0, %v1679
      %1681 = vmatmul.f32.gmra.mxu0 %v1615
      %v1682 = vpop.f32.mrf.mxu0
      %v1683 = vadd.f32 0.0, %v1682
      %1684 = vmatmul.f32.gmra.mxu0 %v1618
      %v1685 = vpop.f32.mrf.mxu0
      %v1686 = vadd.f32 0.0, %v1685
      %1687 = vmatmul.f32.gmra.mxu0 %v1621
      %v1688 = vpop.f32.mrf.mxu0
      %v1689 = vadd.f32 0.0, %v1688
      %1690 = vmatmul.f32.gmra.mxu0 %v1624
      %v1691 = vpop.f32.mrf.mxu0
      %v1692 = vadd.f32 0.0, %v1691
      %1693 = vmatmul.f32.gmra.mxu0 %v1627
      %v1694 = vpop.f32.mrf.mxu0
      %v1695 = vadd.f32 0.0, %v1694
      %1696 = vmatmul.f32.gmra.mxu0 %v1630
      %v1697 = vpop.f32.mrf.mxu0
      %v1698 = vadd.f32 0.0, %v1697
      %1699 = vmatmul.f32.gmra.mxu0 %v1633
      %v1700 = vpop.f32.mrf.mxu0
      %v1701 = vadd.f32 0.0, %v1700
      %1702 = vmatmul.f32.gmra.mxu0 %v1636
      %v1703 = vpop.f32.mrf.mxu0
      %v1704 = vadd.f32 0.0, %v1703
      %1705 = vmatmul.f32.gmra.mxu0 %v1639
      %v1706 = vpop.f32.mrf.mxu0
      %v1707 = vadd.f32 0.0, %v1706
      %1708 = vmatmul.f32.gmra.mxu0 %v1642
      %v1709 = vpop.f32.mrf.mxu0
      %v1710 = vadd.f32 0.0, %v1709
      %1711 = vmatmul.f32.gmra.mxu0 %v1645
      %v1712 = vpop.f32.mrf.mxu0
      %v1713 = vadd.f32 0.0, %v1712
      %1714 = vmatmul.f32.gmra.mxu0 %v1648
      %v1715 = vpop.f32.mrf.mxu0
      %v1716 = vadd.f32 0.0, %v1715
      %1717 = vmatmul.f32.gmra.mxu0 %v1651
      %v1718 = vpop.f32.mrf.mxu0
      %v1719 = vadd.f32 0.0, %v1718
      %1720 = vdwg.mxu0
      %v1722 = vsel %vm235, %v1569, 0
      %v1725 = vsel %vm235, %v1570, 0
      %v1728 = vsel %vm235, %v1571, 0
      %v1731 = vsel %vm235, %v1572, 0
      %v1734 = vsel %vm235, %v1573, 0
      %v1737 = vsel %vm235, %v1574, 0
      %v1740 = vsel %vm235, %v1575, 0
      %v1743 = vsel %vm235, %v1576, 0
      %v1746 = vsel %vm235, %v1577, 0
      %v1749 = vsel %vm235, %v1578, 0
      %v1752 = vsel %vm235, %v1579, 0
      %v1755 = vsel %vm235, %v1580, 0
      %v1758 = vsel %vm235, %v1581, 0
      %v1761 = vsel %vm235, %v1582, 0
      %v1764 = vsel %vm235, %v1583, 0
      %v1767 = vsel %vm235, %v1584, 0
      %v1770 = vsel %vm284, %v1586, 0
      %1772 = vmatpush.msra.mxu0 0.0
      %1773 = vmatpush.msra.mxu0 0.0
      %1774 = vmatpush.msra.mxu0 0.0
      %1775 = vmatpush.msra.mxu0 0.0
      %1776 = vmatpush.msra.mxu0 0.0
      %1777 = vmatpush.msra.mxu0 0.0
      %1778 = vmatpush.msra.mxu0 0.0
      %1779 = vmatpush.msra.mxu0 0.0
      %1780 = vmatpush.msra.mxu0 0.0
      %1781 = vmatpush.msra.mxu0 0.0
      %1782 = vmatpush.msra.mxu0 0.0
      %1783 = vmatpush.msra.mxu0 0.0
      %1784 = vmatpush.msra.mxu0 0.0
      %1785 = vmatpush.msra.mxu0 0.0
      %1786 = vmatpush.msra.mxu0 0.0
      %1787 = vmatpush.msra.mxu0 %v1770
      %1788 = vmatmul.f32.gmra.mxu0 %v1722
      %v1789 = vpop.f32.mrf.mxu0
      %v1790 = vadd.f32 %v1674, %v1789
      %1791 = vmatmul.f32.gmra.mxu0 %v1725
      %v1792 = vpop.f32.mrf.mxu0
      %v1793 = vadd.f32 %v1677, %v1792
      %1794 = vmatmul.f32.gmra.mxu0 %v1728
      %v1795 = vpop.f32.mrf.mxu0
      %v1796 = vadd.f32 %v1680, %v1795
      %1797 = vmatmul.f32.gmra.mxu0 %v1731
      %v1798 = vpop.f32.mrf.mxu0
      %v1799 = vadd.f32 %v1683, %v1798
      %1800 = vmatmul.f32.gmra.mxu0 %v1734
      %v1801 = vpop.f32.mrf.mxu0
      %v1802 = vadd.f32 %v1686, %v1801
      %1803 = vmatmul.f32.gmra.mxu0 %v1737
      %v1804 = vpop.f32.mrf.mxu0
      %v1805 = vadd.f32 %v1689, %v1804
      %1806 = vmatmul.f32.gmra.mxu0 %v1740
      %v1807 = vpop.f32.mrf.mxu0
      %v1808 = vadd.f32 %v1692, %v1807
      %1809 = vmatmul.f32.gmra.mxu0 %v1743
      %v1810 = vpop.f32.mrf.mxu0
      %v1811 = vadd.f32 %v1695, %v1810
      %1812 = vmatmul.f32.gmra.mxu0 %v1746
      %v1813 = vpop.f32.mrf.mxu0
      %v1814 = vadd.f32 %v1698, %v1813
      %1815 = vmatmul.f32.gmra.mxu0 %v1749
      %v1816 = vpop.f32.mrf.mxu0
      %v1817 = vadd.f32 %v1701, %v1816
      %1818 = vmatmul.f32.gmra.mxu0 %v1752
      %v1819 = vpop.f32.mrf.mxu0
      %v1820 = vadd.f32 %v1704, %v1819
      %1821 = vmatmul.f32.gmra.mxu0 %v1755
      %v1822 = vpop.f32.mrf.mxu0
      %v1823 = vadd.f32 %v1707, %v1822
      %1824 = vmatmul.f32.gmra.mxu0 %v1758
      %v1825 = vpop.f32.mrf.mxu0
      %v1826 = vadd.f32 %v1710, %v1825
      %1827 = vmatmul.f32.gmra.mxu0 %v1761
      %v1828 = vpop.f32.mrf.mxu0
      %v1829 = vadd.f32 %v1713, %v1828
      %1830 = vmatmul.f32.gmra.mxu0 %v1764
      %v1831 = vpop.f32.mrf.mxu0
      %v1832 = vadd.f32 %v1716, %v1831
      %1833 = vmatmul.f32.gmra.mxu0 %v1767
      %v1834 = vpop.f32.mrf.mxu0
      %v1835 = vadd.f32 %v1719, %v1834
      %1836 = vdwg.mxu0
      %s1837 = sadd.s32 %s196, 2
      %s1838 = smul.u32 %s1837, 24
      %s1839 = scalar_lea.vmem %s184, %s1838
      %v1840 = vld [vmem:[%s1839] sm:$0xff]
      %v1841 = vld [vmem:[%s1839 + $0x8] sm:$0xff]
      %v1842 = vld [vmem:[%s1839 + $0x18] sm:$0xff]
      %v1843 = vld [vmem:[%s1839 + $0x20] sm:$0xff]
      %v1844 = vld [vmem:[%s1839 + $0x30] sm:$0xff]
      %v1845 = vld [vmem:[%s1839 + $0x38] sm:$0xff]
      %v1846 = vld [vmem:[%s1839 + $0x48] sm:$0xff]
      %v1847 = vld [vmem:[%s1839 + $0x50] sm:$0xff]
      %v1848 = vld [vmem:[%s1839 + $0x60] sm:$0xff]
      %v1849 = vld [vmem:[%s1839 + $0x68] sm:$0xff]
      %v1850 = vld [vmem:[%s1839 + $0x78] sm:$0xff]
      %v1851 = vld [vmem:[%s1839 + $0x80] sm:$0xff]
      %v1852 = vld [vmem:[%s1839 + $0x90] sm:$0xff]
      %v1853 = vld [vmem:[%s1839 + $0x98] sm:$0xff]
      %v1854 = vld [vmem:[%s1839 + $0xa8] sm:$0xff]
      %v1855 = vld [vmem:[%s1839 + $0xb0] sm:$0xff]
      %s1856 = scalar_lea.vmem %s1, 40
      %v1857 = vld [vmem:[%s1856] sm:$0xf]
      %v1859 = vsel %vm235, %v1840, 0
      %v1862 = vsel %vm235, %v1841, 0
      %v1865 = vsel %vm235, %v1842, 0
      %v1868 = vsel %vm235, %v1843, 0
      %v1871 = vsel %vm235, %v1844, 0
      %v1874 = vsel %vm235, %v1845, 0
      %v1877 = vsel %vm235, %v1846, 0
      %v1880 = vsel %vm235, %v1847, 0
      %v1883 = vsel %vm235, %v1848, 0
      %v1886 = vsel %vm235, %v1849, 0
      %v1889 = vsel %vm235, %v1850, 0
      %v1892 = vsel %vm235, %v1851, 0
      %v1895 = vsel %vm235, %v1852, 0
      %v1898 = vsel %vm235, %v1853, 0
      %v1901 = vsel %vm235, %v1854, 0
      %v1904 = vsel %vm235, %v1855, 0
      %v1907 = vsel %vm284, %v1857, 0
      %1909 = vmatpush.msra.mxu0 0.0
      %1910 = vmatpush.msra.mxu0 0.0
      %1911 = vmatpush.msra.mxu0 0.0
      %1912 = vmatpush.msra.mxu0 0.0
      %1913 = vmatpush.msra.mxu0 0.0
      %1914 = vmatpush.msra.mxu0 0.0
      %1915 = vmatpush.msra.mxu0 0.0
      %1916 = vmatpush.msra.mxu0 0.0
      %1917 = vmatpush.msra.mxu0 0.0
      %1918 = vmatpush.msra.mxu0 0.0
      %1919 = vmatpush.msra.mxu0 0.0
      %1920 = vmatpush.msra.mxu0 0.0
      %1921 = vmatpush.msra.mxu0 0.0
      %1922 = vmatpush.msra.mxu0 0.0
      %1923 = vmatpush.msra.mxu0 0.0
      %1924 = vmatpush.msra.mxu0 %v1907
      %1925 = vmatmul.f32.gmra.mxu0 %v1859
      %v1926 = vpop.f32.mrf.mxu0
      %v1927 = vadd.f32 0.0, %v1926
      %1928 = vmatmul.f32.gmra.mxu0 %v1862
      %v1929 = vpop.f32.mrf.mxu0
      %v1930 = vadd.f32 0.0, %v1929
      %1931 = vmatmul.f32.gmra.mxu0 %v1865
      %v1932 = vpop.f32.mrf.mxu0
      %v1933 = vadd.f32 0.0, %v1932
      %1934 = vmatmul.f32.gmra.mxu0 %v1868
      %v1935 = vpop.f32.mrf.mxu0
      %v1936 = vadd.f32 0.0, %v1935
      %1937 = vmatmul.f32.gmra.mxu0 %v1871
      %v1938 = vpop.f32.mrf.mxu0
      %v1939 = vadd.f32 0.0, %v1938
      %1940 = vmatmul.f32.gmra.mxu0 %v1874
      %v1941 = vpop.f32.mrf.mxu0
      %v1942 = vadd.f32 0.0, %v1941
      %1943 = vmatmul.f32.gmra.mxu0 %v1877
      %v1944 = vpop.f32.mrf.mxu0
      %v1945 = vadd.f32 0.0, %v1944
      %1946 = vmatmul.f32.gmra.mxu0 %v1880
      %v1947 = vpop.f32.mrf.mxu0
      %v1948 = vadd.f32 0.0, %v1947
      %1949 = vmatmul.f32.gmra.mxu0 %v1883
      %v1950 = vpop.f32.mrf.mxu0
      %v1951 = vadd.f32 0.0, %v1950
      %1952 = vmatmul.f32.gmra.mxu0 %v1886
      %v1953 = vpop.f32.mrf.mxu0
      %v1954 = vadd.f32 0.0, %v1953
      %1955 = vmatmul.f32.gmra.mxu0 %v1889
      %v1956 = vpop.f32.mrf.mxu0
      %v1957 = vadd.f32 0.0, %v1956
      %1958 = vmatmul.f32.gmra.mxu0 %v1892
      %v1959 = vpop.f32.mrf.mxu0
      %v1960 = vadd.f32 0.0, %v1959
      %1961 = vmatmul.f32.gmra.mxu0 %v1895
      %v1962 = vpop.f32.mrf.mxu0
      %v1963 = vadd.f32 0.0, %v1962
      %1964 = vmatmul.f32.gmra.mxu0 %v1898
      %v1965 = vpop.f32.mrf.mxu0
      %v1966 = vadd.f32 0.0, %v1965
      %1967 = vmatmul.f32.gmra.mxu0 %v1901
      %v1968 = vpop.f32.mrf.mxu0
      %v1969 = vadd.f32 0.0, %v1968
      %1970 = vmatmul.f32.gmra.mxu0 %v1904
      %v1971 = vpop.f32.mrf.mxu0
      %v1972 = vadd.f32 0.0, %v1971
      %1973 = vdwg.mxu0
      %v1974 = vadd.f32 %v1790, %v1927
      %v1975 = vadd.f32 %v1793, %v1930
      %v1976 = vadd.f32 %v1796, %v1933
      %v1977 = vadd.f32 %v1799, %v1936
      %v1978 = vadd.f32 %v1802, %v1939
      %v1979 = vadd.f32 %v1805, %v1942
      %v1980 = vadd.f32 %v1808, %v1945
      %v1981 = vadd.f32 %v1811, %v1948
      %v1982 = vadd.f32 %v1814, %v1951
      %v1983 = vadd.f32 %v1817, %v1954
      %v1984 = vadd.f32 %v1820, %v1957
      %v1985 = vadd.f32 %v1823, %v1960
      %v1986 = vadd.f32 %v1826, %v1963
      %v1987 = vadd.f32 %v1829, %v1966
      %v1988 = vadd.f32 %v1832, %v1969
      %v1989 = vadd.f32 %v1835, %v1972
      %v1990 = vld [vmem:[%s1839 + $0x1] sm:$0xff]
      %v1991 = vld [vmem:[%s1839 + $0x9] sm:$0xff]
      %v1992 = vld [vmem:[%s1839 + $0x19] sm:$0xff]
      %v1993 = vld [vmem:[%s1839 + $0x21] sm:$0xff]
      %v1994 = vld [vmem:[%s1839 + $0x31] sm:$0xff]
      %v1995 = vld [vmem:[%s1839 + $0x39] sm:$0xff]
      %v1996 = vld [vmem:[%s1839 + $0x49] sm:$0xff]
      %v1997 = vld [vmem:[%s1839 + $0x51] sm:$0xff]
      %v1998 = vld [vmem:[%s1839 + $0x61] sm:$0xff]
      %v1999 = vld [vmem:[%s1839 + $0x69] sm:$0xff]
      %v2000 = vld [vmem:[%s1839 + $0x79] sm:$0xff]
      %v2001 = vld [vmem:[%s1839 + $0x81] sm:$0xff]
      %v2002 = vld [vmem:[%s1839 + $0x91] sm:$0xff]
      %v2003 = vld [vmem:[%s1839 + $0x99] sm:$0xff]
      %v2004 = vld [vmem:[%s1839 + $0xa9] sm:$0xff]
      %v2005 = vld [vmem:[%s1839 + $0xb1] sm:$0xff]
      %s2006 = scalar_lea.vmem %s1, 44
      %v2007 = vld [vmem:[%s2006] sm:$0xf]
      %v2009 = vsel %vm235, %v1990, 0
      %v2012 = vsel %vm235, %v1991, 0
      %v2015 = vsel %vm235, %v1992, 0
      %v2018 = vsel %vm235, %v1993, 0
      %v2021 = vsel %vm235, %v1994, 0
      %v2024 = vsel %vm235, %v1995, 0
      %v2027 = vsel %vm235, %v1996, 0
      %v2030 = vsel %vm235, %v1997, 0
      %v2033 = vsel %vm235, %v1998, 0
      %v2036 = vsel %vm235, %v1999, 0
      %v2039 = vsel %vm235, %v2000, 0
      %v2042 = vsel %vm235, %v2001, 0
      %v2045 = vsel %vm235, %v2002, 0
      %v2048 = vsel %vm235, %v2003, 0
      %v2051 = vsel %vm235, %v2004, 0
      %v2054 = vsel %vm235, %v2005, 0
      %v2057 = vsel %vm284, %v2007, 0
      %2059 = vmatpush.msra.mxu0 0.0
      %2060 = vmatpush.msra.mxu0 0.0
      %2061 = vmatpush.msra.mxu0 0.0
      %2062 = vmatpush.msra.mxu0 0.0
      %2063 = vmatpush.msra.mxu0 0.0
      %2064 = vmatpush.msra.mxu0 0.0
      %2065 = vmatpush.msra.mxu0 0.0
      %2066 = vmatpush.msra.mxu0 0.0
      %2067 = vmatpush.msra.mxu0 0.0
      %2068 = vmatpush.msra.mxu0 0.0
      %2069 = vmatpush.msra.mxu0 0.0
      %2070 = vmatpush.msra.mxu0 0.0
      %2071 = vmatpush.msra.mxu0 0.0
      %2072 = vmatpush.msra.mxu0 0.0
      %2073 = vmatpush.msra.mxu0 0.0
      %2074 = vmatpush.msra.mxu0 %v2057
      %2075 = vmatmul.f32.gmra.mxu0 %v2009
      %v2076 = vpop.f32.mrf.mxu0
      %v2077 = vadd.f32 0.0, %v2076
      %2078 = vmatmul.f32.gmra.mxu0 %v2012
      %v2079 = vpop.f32.mrf.mxu0
      %v2080 = vadd.f32 0.0, %v2079
      %2081 = vmatmul.f32.gmra.mxu0 %v2015
      %v2082 = vpop.f32.mrf.mxu0
      %v2083 = vadd.f32 0.0, %v2082
      %2084 = vmatmul.f32.gmra.mxu0 %v2018
      %v2085 = vpop.f32.mrf.mxu0
      %v2086 = vadd.f32 0.0, %v2085
      %2087 = vmatmul.f32.gmra.mxu0 %v2021
      %v2088 = vpop.f32.mrf.mxu0
      %v2089 = vadd.f32 0.0, %v2088
      %2090 = vmatmul.f32.gmra.mxu0 %v2024
      %v2091 = vpop.f32.mrf.mxu0
      %v2092 = vadd.f32 0.0, %v2091
      %2093 = vmatmul.f32.gmra.mxu0 %v2027
      %v2094 = vpop.f32.mrf.mxu0
      %v2095 = vadd.f32 0.0, %v2094
      %2096 = vmatmul.f32.gmra.mxu0 %v2030
      %v2097 = vpop.f32.mrf.mxu0
      %v2098 = vadd.f32 0.0, %v2097
      %2099 = vmatmul.f32.gmra.mxu0 %v2033
      %v2100 = vpop.f32.mrf.mxu0
      %v2101 = vadd.f32 0.0, %v2100
      %2102 = vmatmul.f32.gmra.mxu0 %v2036
      %v2103 = vpop.f32.mrf.mxu0
      %v2104 = vadd.f32 0.0, %v2103
      %2105 = vmatmul.f32.gmra.mxu0 %v2039
      %v2106 = vpop.f32.mrf.mxu0
      %v2107 = vadd.f32 0.0, %v2106
      %2108 = vmatmul.f32.gmra.mxu0 %v2042
      %v2109 = vpop.f32.mrf.mxu0
      %v2110 = vadd.f32 0.0, %v2109
      %2111 = vmatmul.f32.gmra.mxu0 %v2045
      %v2112 = vpop.f32.mrf.mxu0
      %v2113 = vadd.f32 0.0, %v2112
      %2114 = vmatmul.f32.gmra.mxu0 %v2048
      %v2115 = vpop.f32.mrf.mxu0
      %v2116 = vadd.f32 0.0, %v2115
      %2117 = vmatmul.f32.gmra.mxu0 %v2051
      %v2118 = vpop.f32.mrf.mxu0
      %v2119 = vadd.f32 0.0, %v2118
      %2120 = vmatmul.f32.gmra.mxu0 %v2054
      %v2121 = vpop.f32.mrf.mxu0
      %v2122 = vadd.f32 0.0, %v2121
      %2123 = vdwg.mxu0
      %v2124 = vadd.f32 %v1974, %v2077
      %v2125 = vadd.f32 %v1975, %v2080
      %v2126 = vadd.f32 %v1976, %v2083
      %v2127 = vadd.f32 %v1977, %v2086
      %v2128 = vadd.f32 %v1978, %v2089
      %v2129 = vadd.f32 %v1979, %v2092
      %v2130 = vadd.f32 %v1980, %v2095
      %v2131 = vadd.f32 %v1981, %v2098
      %v2132 = vadd.f32 %v1982, %v2101
      %v2133 = vadd.f32 %v1983, %v2104
      %v2134 = vadd.f32 %v1984, %v2107
      %v2135 = vadd.f32 %v1985, %v2110
      %v2136 = vadd.f32 %v1986, %v2113
      %v2137 = vadd.f32 %v1987, %v2116
      %v2138 = vadd.f32 %v1988, %v2119
      %v2139 = vadd.f32 %v1989, %v2122
      %v2140 = vadd.f32 %v2124, %v773
      %v2141 = vadd.f32 %v2125, %v773
      %v2142 = vadd.f32 %v2126, %v773
      %v2143 = vadd.f32 %v2127, %v773
      %v2144 = vadd.f32 %v2128, %v773
      %v2145 = vadd.f32 %v2129, %v773
      %v2146 = vadd.f32 %v2130, %v773
      %v2147 = vadd.f32 %v2131, %v773
      %v2148 = vadd.f32 %v2132, %v773
      %v2149 = vadd.f32 %v2133, %v773
      %v2150 = vadd.f32 %v2134, %v773
      %v2151 = vadd.f32 %v2135, %v773
      %v2152 = vadd.f32 %v2136, %v773
      %v2153 = vadd.f32 %v2137, %v773
      %v2154 = vadd.f32 %v2138, %v773
      %v2155 = vadd.f32 %v2139, %v773
      %v2156 = vadd.f32 %v2140, 3.0
      %v2157 = vadd.f32 %v2141, 3.0
      %v2158 = vadd.f32 %v2142, 3.0
      %v2159 = vadd.f32 %v2143, 3.0
      %v2160 = vadd.f32 %v2144, 3.0
      %v2161 = vadd.f32 %v2145, 3.0
      %v2162 = vadd.f32 %v2146, 3.0
      %v2163 = vadd.f32 %v2147, 3.0
      %v2164 = vadd.f32 %v2148, 3.0
      %v2165 = vadd.f32 %v2149, 3.0
      %v2166 = vadd.f32 %v2150, 3.0
      %v2167 = vadd.f32 %v2151, 3.0
      %v2168 = vadd.f32 %v2152, 3.0
      %v2169 = vadd.f32 %v2153, 3.0
      %v2170 = vadd.f32 %v2154, 3.0
      %v2171 = vadd.f32 %v2155, 3.0
      %v2172 = vmax.f32 %v2156, 0.0
      %v2173 = vmax.f32 %v2157, 0.0
      %v2174 = vmax.f32 %v2158, 0.0
      %v2175 = vmax.f32 %v2159, 0.0
      %v2176 = vmax.f32 %v2160, 0.0
      %v2177 = vmax.f32 %v2161, 0.0
      %v2178 = vmax.f32 %v2162, 0.0
      %v2179 = vmax.f32 %v2163, 0.0
      %v2180 = vmax.f32 %v2164, 0.0
      %v2181 = vmax.f32 %v2165, 0.0
      %v2182 = vmax.f32 %v2166, 0.0
      %v2183 = vmax.f32 %v2167, 0.0
      %v2184 = vmax.f32 %v2168, 0.0
      %v2185 = vmax.f32 %v2169, 0.0
      %v2186 = vmax.f32 %v2170, 0.0
      %v2187 = vmax.f32 %v2171, 0.0
      %v2188 = vmin.f32 %v2172, 6.0
      %v2189 = vmin.f32 %v2173, 6.0
      %v2190 = vmin.f32 %v2174, 6.0
      %v2191 = vmin.f32 %v2175, 6.0
      %v2192 = vmin.f32 %v2176, 6.0
      %v2193 = vmin.f32 %v2177, 6.0
      %v2194 = vmin.f32 %v2178, 6.0
      %v2195 = vmin.f32 %v2179, 6.0
      %v2196 = vmin.f32 %v2180, 6.0
      %v2197 = vmin.f32 %v2181, 6.0
      %v2198 = vmin.f32 %v2182, 6.0
      %v2199 = vmin.f32 %v2183, 6.0
      %v2200 = vmin.f32 %v2184, 6.0
      %v2201 = vmin.f32 %v2185, 6.0
      %v2202 = vmin.f32 %v2186, 6.0
      %v2203 = vmin.f32 %v2187, 6.0
      %v2204 = vmul.f32 %v2140, %v2188
      %v2205 = vmul.f32 %v2141, %v2189
      %v2206 = vmul.f32 %v2142, %v2190
      %v2207 = vmul.f32 %v2143, %v2191
      %v2208 = vmul.f32 %v2144, %v2192
      %v2209 = vmul.f32 %v2145, %v2193
      %v2210 = vmul.f32 %v2146, %v2194
      %v2211 = vmul.f32 %v2147, %v2195
      %v2212 = vmul.f32 %v2148, %v2196
      %v2213 = vmul.f32 %v2149, %v2197
      %v2214 = vmul.f32 %v2150, %v2198
      %v2215 = vmul.f32 %v2151, %v2199
      %v2216 = vmul.f32 %v2152, %v2200
      %v2217 = vmul.f32 %v2153, %v2201
      %v2218 = vmul.f32 %v2154, %v2202
      %v2219 = vmul.f32 %v2155, %v2203
      %v2220 = vmul.f32 %v2204, 0.16666667
      %v2221 = vmul.f32 %v2205, 0.16666667
      %v2222 = vmul.f32 %v2206, 0.16666667
      %v2223 = vmul.f32 %v2207, 0.16666667
      %v2224 = vmul.f32 %v2208, 0.16666667
      %v2225 = vmul.f32 %v2209, 0.16666667
      %v2226 = vmul.f32 %v2210, 0.16666667
      %v2227 = vmul.f32 %v2211, 0.16666667
      %v2228 = vmul.f32 %v2212, 0.16666667
      %v2229 = vmul.f32 %v2213, 0.16666667
      %v2230 = vmul.f32 %v2214, 0.16666667
      %v2231 = vmul.f32 %v2215, 0.16666667
      %v2232 = vmul.f32 %v2216, 0.16666667
      %v2233 = vmul.f32 %v2217, 0.16666667
      %v2234 = vmul.f32 %v2218, 0.16666667
      %v2235 = vmul.f32 %v2219, 0.16666667
      %s2236 = scalar_lea.vmem %s194, 32
      %2237 = vst.msk [vmem:[%s2236] sm:$0xff] %vm871, %v2220
      %2238 = vst.msk [vmem:[%s2236 + $0x8] sm:$0xff] %vm871, %v2221
      %2239 = vst.msk [vmem:[%s2236 + $0x40] sm:$0xff] %vm871, %v2222
      %2240 = vst.msk [vmem:[%s2236 + $0x48] sm:$0xff] %vm871, %v2223
      %2241 = vst.msk [vmem:[%s2236 + $0x80] sm:$0xff] %vm871, %v2224
      %2242 = vst.msk [vmem:[%s2236 + $0x88] sm:$0xff] %vm871, %v2225
      %2243 = vst.msk [vmem:[%s2236 + $0xc0] sm:$0xff] %vm871, %v2226
      %2244 = vst.msk [vmem:[%s2236 + $0xc8] sm:$0xff] %vm871, %v2227
      %2245 = vst.msk [vmem:[%s2236 + $0x100] sm:$0xff] %vm871, %v2228
      %2246 = vst.msk [vmem:[%s2236 + $0x108] sm:$0xff] %vm871, %v2229
      %2247 = vst.msk [vmem:[%s2236 + $0x140] sm:$0xff] %vm871, %v2230
      %2248 = vst.msk [vmem:[%s2236 + $0x148] sm:$0xff] %vm871, %v2231
      %2249 = vst.msk [vmem:[%s2236 + $0x180] sm:$0xff] %vm871, %v2232
      %2250 = vst.msk [vmem:[%s2236 + $0x188] sm:$0xff] %vm871, %v2233
      %2251 = vst.msk [vmem:[%s2236 + $0x1c0] sm:$0xff] %vm871, %v2234
      %2252 = vst.msk [vmem:[%s2236 + $0x1c8] sm:$0xff] %vm871, %v2235
      %v2253 = vld [vmem:[%s471 + $0x1] sm:$0xff]
      %v2254 = vld [vmem:[%s471 + $0x9] sm:$0xff]
      %v2255 = vld [vmem:[%s471 + $0x19] sm:$0xff]
      %v2256 = vld [vmem:[%s471 + $0x21] sm:$0xff]
      %v2257 = vld [vmem:[%s471 + $0x31] sm:$0xff]
      %v2258 = vld [vmem:[%s471 + $0x39] sm:$0xff]
      %v2259 = vld [vmem:[%s471 + $0x49] sm:$0xff]
      %v2260 = vld [vmem:[%s471 + $0x51] sm:$0xff]
      %v2261 = vld [vmem:[%s471 + $0x61] sm:$0xff]
      %v2262 = vld [vmem:[%s471 + $0x69] sm:$0xff]
      %v2263 = vld [vmem:[%s471 + $0x79] sm:$0xff]
      %v2264 = vld [vmem:[%s471 + $0x81] sm:$0xff]
      %v2265 = vld [vmem:[%s471 + $0x91] sm:$0xff]
      %v2266 = vld [vmem:[%s471 + $0x99] sm:$0xff]
      %v2267 = vld [vmem:[%s471 + $0xa9] sm:$0xff]
      %v2268 = vld [vmem:[%s471 + $0xb1] sm:$0xff]
      %s2269 = scalar_lea.vmem %s1, 48
      %v2270 = vld [vmem:[%s2269] sm:$0xf]
      %v2271 = vld [vmem:[%s471 + $0x2] sm:$0xff]
      %v2272 = vld [vmem:[%s471 + $0xa] sm:$0xff]
      %v2273 = vld [vmem:[%s471 + $0x1a] sm:$0xff]
      %v2274 = vld [vmem:[%s471 + $0x22] sm:$0xff]
      %v2275 = vld [vmem:[%s471 + $0x32] sm:$0xff]
      %v2276 = vld [vmem:[%s471 + $0x3a] sm:$0xff]
      %v2277 = vld [vmem:[%s471 + $0x4a] sm:$0xff]
      %v2278 = vld [vmem:[%s471 + $0x52] sm:$0xff]
      %v2279 = vld [vmem:[%s471 + $0x62] sm:$0xff]
      %v2280 = vld [vmem:[%s471 + $0x6a] sm:$0xff]
      %v2281 = vld [vmem:[%s471 + $0x7a] sm:$0xff]
      %v2282 = vld [vmem:[%s471 + $0x82] sm:$0xff]
      %v2283 = vld [vmem:[%s471 + $0x92] sm:$0xff]
      %v2284 = vld [vmem:[%s471 + $0x9a] sm:$0xff]
      %v2285 = vld [vmem:[%s471 + $0xaa] sm:$0xff]
      %v2286 = vld [vmem:[%s471 + $0xb2] sm:$0xff]
      %s2287 = scalar_lea.vmem %s1, 52
      %v2288 = vld [vmem:[%s2287] sm:$0xf]
      %v2290 = vsel %vm235, %v2271, 0
      %v2293 = vsel %vm235, %v2272, 0
      %v2296 = vsel %vm235, %v2273, 0
      %v2299 = vsel %vm235, %v2274, 0
      %v2302 = vsel %vm235, %v2275, 0
      %v2305 = vsel %vm235, %v2276, 0
      %v2308 = vsel %vm235, %v2277, 0
      %v2311 = vsel %vm235, %v2278, 0
      %v2314 = vsel %vm235, %v2279, 0
      %v2317 = vsel %vm235, %v2280, 0
      %v2320 = vsel %vm235, %v2281, 0
      %v2323 = vsel %vm235, %v2282, 0
      %v2326 = vsel %vm235, %v2283, 0
      %v2329 = vsel %vm235, %v2284, 0
      %v2332 = vsel %vm235, %v2285, 0
      %v2335 = vsel %vm235, %v2286, 0
      %v2338 = vsel %vm284, %v2288, 0
      %2340 = vmatpush.msra.mxu0 0.0
      %2341 = vmatpush.msra.mxu0 0.0
      %2342 = vmatpush.msra.mxu0 0.0
      %2343 = vmatpush.msra.mxu0 0.0
      %2344 = vmatpush.msra.mxu0 0.0
      %2345 = vmatpush.msra.mxu0 0.0
      %2346 = vmatpush.msra.mxu0 0.0
      %2347 = vmatpush.msra.mxu0 0.0
      %2348 = vmatpush.msra.mxu0 0.0
      %2349 = vmatpush.msra.mxu0 0.0
      %2350 = vmatpush.msra.mxu0 0.0
      %2351 = vmatpush.msra.mxu0 0.0
      %2352 = vmatpush.msra.mxu0 0.0
      %2353 = vmatpush.msra.mxu0 0.0
      %2354 = vmatpush.msra.mxu0 0.0
      %2355 = vmatpush.msra.mxu0 %v2338
      %2356 = vmatmul.f32.gmra.mxu0 %v2290
      %v2357 = vpop.f32.mrf.mxu0
      %v2358 = vadd.f32 0.0, %v2357
      %2359 = vmatmul.f32.gmra.mxu0 %v2293
      %v2360 = vpop.f32.mrf.mxu0
      %v2361 = vadd.f32 0.0, %v2360
      %2362 = vmatmul.f32.gmra.mxu0 %v2296
      %v2363 = vpop.f32.mrf.mxu0
      %v2364 = vadd.f32 0.0, %v2363
      %2365 = vmatmul.f32.gmra.mxu0 %v2299
      %v2366 = vpop.f32.mrf.mxu0
      %v2367 = vadd.f32 0.0, %v2366
      %2368 = vmatmul.f32.gmra.mxu0 %v2302
      %v2369 = vpop.f32.mrf.mxu0
      %v2370 = vadd.f32 0.0, %v2369
      %2371 = vmatmul.f32.gmra.mxu0 %v2305
      %v2372 = vpop.f32.mrf.mxu0
      %v2373 = vadd.f32 0.0, %v2372
      %2374 = vmatmul.f32.gmra.mxu0 %v2308
      %v2375 = vpop.f32.mrf.mxu0
      %v2376 = vadd.f32 0.0, %v2375
      %2377 = vmatmul.f32.gmra.mxu0 %v2311
      %v2378 = vpop.f32.mrf.mxu0
      %v2379 = vadd.f32 0.0, %v2378
      %2380 = vmatmul.f32.gmra.mxu0 %v2314
      %v2381 = vpop.f32.mrf.mxu0
      %v2382 = vadd.f32 0.0, %v2381
      %2383 = vmatmul.f32.gmra.mxu0 %v2317
      %v2384 = vpop.f32.mrf.mxu0
      %v2385 = vadd.f32 0.0, %v2384
      %2386 = vmatmul.f32.gmra.mxu0 %v2320
      %v2387 = vpop.f32.mrf.mxu0
      %v2388 = vadd.f32 0.0, %v2387
      %2389 = vmatmul.f32.gmra.mxu0 %v2323
      %v2390 = vpop.f32.mrf.mxu0
      %v2391 = vadd.f32 0.0, %v2390
      %2392 = vmatmul.f32.gmra.mxu0 %v2326
      %v2393 = vpop.f32.mrf.mxu0
      %v2394 = vadd.f32 0.0, %v2393
      %2395 = vmatmul.f32.gmra.mxu0 %v2329
      %v2396 = vpop.f32.mrf.mxu0
      %v2397 = vadd.f32 0.0, %v2396
      %2398 = vmatmul.f32.gmra.mxu0 %v2332
      %v2399 = vpop.f32.mrf.mxu0
      %v2400 = vadd.f32 0.0, %v2399
      %2401 = vmatmul.f32.gmra.mxu0 %v2335
      %v2402 = vpop.f32.mrf.mxu0
      %v2403 = vadd.f32 0.0, %v2402
      %2404 = vdwg.mxu0
      %v2406 = vsel %vm235, %v2253, 0
      %v2409 = vsel %vm235, %v2254, 0
      %v2412 = vsel %vm235, %v2255, 0
      %v2415 = vsel %vm235, %v2256, 0
      %v2418 = vsel %vm235, %v2257, 0
      %v2421 = vsel %vm235, %v2258, 0
      %v2424 = vsel %vm235, %v2259, 0
      %v2427 = vsel %vm235, %v2260, 0
      %v2430 = vsel %vm235, %v2261, 0
      %v2433 = vsel %vm235, %v2262, 0
      %v2436 = vsel %vm235, %v2263, 0
      %v2439 = vsel %vm235, %v2264, 0
      %v2442 = vsel %vm235, %v2265, 0
      %v2445 = vsel %vm235, %v2266, 0
      %v2448 = vsel %vm235, %v2267, 0
      %v2451 = vsel %vm235, %v2268, 0
      %v2454 = vsel %vm284, %v2270, 0
      %2456 = vmatpush.msra.mxu0 0.0
      %2457 = vmatpush.msra.mxu0 0.0
      %2458 = vmatpush.msra.mxu0 0.0
      %2459 = vmatpush.msra.mxu0 0.0
      %2460 = vmatpush.msra.mxu0 0.0
      %2461 = vmatpush.msra.mxu0 0.0
      %2462 = vmatpush.msra.mxu0 0.0
      %2463 = vmatpush.msra.mxu0 0.0
      %2464 = vmatpush.msra.mxu0 0.0
      %2465 = vmatpush.msra.mxu0 0.0
      %2466 = vmatpush.msra.mxu0 0.0
      %2467 = vmatpush.msra.mxu0 0.0
      %2468 = vmatpush.msra.mxu0 0.0
      %2469 = vmatpush.msra.mxu0 0.0
      %2470 = vmatpush.msra.mxu0 0.0
      %2471 = vmatpush.msra.mxu0 %v2454
      %2472 = vmatmul.f32.gmra.mxu0 %v2406
      %v2473 = vpop.f32.mrf.mxu0
      %v2474 = vadd.f32 %v2358, %v2473
      %2475 = vmatmul.f32.gmra.mxu0 %v2409
      %v2476 = vpop.f32.mrf.mxu0
      %v2477 = vadd.f32 %v2361, %v2476
      %2478 = vmatmul.f32.gmra.mxu0 %v2412
      %v2479 = vpop.f32.mrf.mxu0
      %v2480 = vadd.f32 %v2364, %v2479
      %2481 = vmatmul.f32.gmra.mxu0 %v2415
      %v2482 = vpop.f32.mrf.mxu0
      %v2483 = vadd.f32 %v2367, %v2482
      %2484 = vmatmul.f32.gmra.mxu0 %v2418
      %v2485 = vpop.f32.mrf.mxu0
      %v2486 = vadd.f32 %v2370, %v2485
      %2487 = vmatmul.f32.gmra.mxu0 %v2421
      %v2488 = vpop.f32.mrf.mxu0
      %v2489 = vadd.f32 %v2373, %v2488
      %2490 = vmatmul.f32.gmra.mxu0 %v2424
      %v2491 = vpop.f32.mrf.mxu0
      %v2492 = vadd.f32 %v2376, %v2491
      %2493 = vmatmul.f32.gmra.mxu0 %v2427
      %v2494 = vpop.f32.mrf.mxu0
      %v2495 = vadd.f32 %v2379, %v2494
      %2496 = vmatmul.f32.gmra.mxu0 %v2430
      %v2497 = vpop.f32.mrf.mxu0
      %v2498 = vadd.f32 %v2382, %v2497
      %2499 = vmatmul.f32.gmra.mxu0 %v2433
      %v2500 = vpop.f32.mrf.mxu0
      %v2501 = vadd.f32 %v2385, %v2500
      %2502 = vmatmul.f32.gmra.mxu0 %v2436
      %v2503 = vpop.f32.mrf.mxu0
      %v2504 = vadd.f32 %v2388, %v2503
      %2505 = vmatmul.f32.gmra.mxu0 %v2439
      %v2506 = vpop.f32.mrf.mxu0
      %v2507 = vadd.f32 %v2391, %v2506
      %2508 = vmatmul.f32.gmra.mxu0 %v2442
      %v2509 = vpop.f32.mrf.mxu0
      %v2510 = vadd.f32 %v2394, %v2509
      %2511 = vmatmul.f32.gmra.mxu0 %v2445
      %v2512 = vpop.f32.mrf.mxu0
      %v2513 = vadd.f32 %v2397, %v2512
      %2514 = vmatmul.f32.gmra.mxu0 %v2448
      %v2515 = vpop.f32.mrf.mxu0
      %v2516 = vadd.f32 %v2400, %v2515
      %2517 = vmatmul.f32.gmra.mxu0 %v2451
      %v2518 = vpop.f32.mrf.mxu0
      %v2519 = vadd.f32 %v2403, %v2518
      %2520 = vdwg.mxu0
      %v2521 = vld [vmem:[%s1839 + $0x1] sm:$0xff]
      %v2522 = vld [vmem:[%s1839 + $0x9] sm:$0xff]
      %v2523 = vld [vmem:[%s1839 + $0x19] sm:$0xff]
      %v2524 = vld [vmem:[%s1839 + $0x21] sm:$0xff]
      %v2525 = vld [vmem:[%s1839 + $0x31] sm:$0xff]
      %v2526 = vld [vmem:[%s1839 + $0x39] sm:$0xff]
      %v2527 = vld [vmem:[%s1839 + $0x49] sm:$0xff]
      %v2528 = vld [vmem:[%s1839 + $0x51] sm:$0xff]
      %v2529 = vld [vmem:[%s1839 + $0x61] sm:$0xff]
      %v2530 = vld [vmem:[%s1839 + $0x69] sm:$0xff]
      %v2531 = vld [vmem:[%s1839 + $0x79] sm:$0xff]
      %v2532 = vld [vmem:[%s1839 + $0x81] sm:$0xff]
      %v2533 = vld [vmem:[%s1839 + $0x91] sm:$0xff]
      %v2534 = vld [vmem:[%s1839 + $0x99] sm:$0xff]
      %v2535 = vld [vmem:[%s1839 + $0xa9] sm:$0xff]
      %v2536 = vld [vmem:[%s1839 + $0xb1] sm:$0xff]
      %s2537 = scalar_lea.vmem %s1, 56
      %v2538 = vld [vmem:[%s2537] sm:$0xf]
      %v2540 = vsel %vm235, %v2521, 0
      %v2543 = vsel %vm235, %v2522, 0
      %v2546 = vsel %vm235, %v2523, 0
      %v2549 = vsel %vm235, %v2524, 0
      %v2552 = vsel %vm235, %v2525, 0
      %v2555 = vsel %vm235, %v2526, 0
      %v2558 = vsel %vm235, %v2527, 0
      %v2561 = vsel %vm235, %v2528, 0
      %v2564 = vsel %vm235, %v2529, 0
      %v2567 = vsel %vm235, %v2530, 0
      %v2570 = vsel %vm235, %v2531, 0
      %v2573 = vsel %vm235, %v2532, 0
      %v2576 = vsel %vm235, %v2533, 0
      %v2579 = vsel %vm235, %v2534, 0
      %v2582 = vsel %vm235, %v2535, 0
      %v2585 = vsel %vm235, %v2536, 0
      %v2588 = vsel %vm284, %v2538, 0
      %2590 = vmatpush.msra.mxu0 0.0
      %2591 = vmatpush.msra.mxu0 0.0
      %2592 = vmatpush.msra.mxu0 0.0
      %2593 = vmatpush.msra.mxu0 0.0
      %2594 = vmatpush.msra.mxu0 0.0
      %2595 = vmatpush.msra.mxu0 0.0
      %2596 = vmatpush.msra.mxu0 0.0
      %2597 = vmatpush.msra.mxu0 0.0
      %2598 = vmatpush.msra.mxu0 0.0
      %2599 = vmatpush.msra.mxu0 0.0
      %2600 = vmatpush.msra.mxu0 0.0
      %2601 = vmatpush.msra.mxu0 0.0
      %2602 = vmatpush.msra.mxu0 0.0
      %2603 = vmatpush.msra.mxu0 0.0
      %2604 = vmatpush.msra.mxu0 0.0
      %2605 = vmatpush.msra.mxu0 %v2588
      %2606 = vmatmul.f32.gmra.mxu0 %v2540
      %v2607 = vpop.f32.mrf.mxu0
      %v2608 = vadd.f32 0.0, %v2607
      %2609 = vmatmul.f32.gmra.mxu0 %v2543
      %v2610 = vpop.f32.mrf.mxu0
      %v2611 = vadd.f32 0.0, %v2610
      %2612 = vmatmul.f32.gmra.mxu0 %v2546
      %v2613 = vpop.f32.mrf.mxu0
      %v2614 = vadd.f32 0.0, %v2613
      %2615 = vmatmul.f32.gmra.mxu0 %v2549
      %v2616 = vpop.f32.mrf.mxu0
      %v2617 = vadd.f32 0.0, %v2616
      %2618 = vmatmul.f32.gmra.mxu0 %v2552
      %v2619 = vpop.f32.mrf.mxu0
      %v2620 = vadd.f32 0.0, %v2619
      %2621 = vmatmul.f32.gmra.mxu0 %v2555
      %v2622 = vpop.f32.mrf.mxu0
      %v2623 = vadd.f32 0.0, %v2622
      %2624 = vmatmul.f32.gmra.mxu0 %v2558
      %v2625 = vpop.f32.mrf.mxu0
      %v2626 = vadd.f32 0.0, %v2625
      %2627 = vmatmul.f32.gmra.mxu0 %v2561
      %v2628 = vpop.f32.mrf.mxu0
      %v2629 = vadd.f32 0.0, %v2628
      %2630 = vmatmul.f32.gmra.mxu0 %v2564
      %v2631 = vpop.f32.mrf.mxu0
      %v2632 = vadd.f32 0.0, %v2631
      %2633 = vmatmul.f32.gmra.mxu0 %v2567
      %v2634 = vpop.f32.mrf.mxu0
      %v2635 = vadd.f32 0.0, %v2634
      %2636 = vmatmul.f32.gmra.mxu0 %v2570
      %v2637 = vpop.f32.mrf.mxu0
      %v2638 = vadd.f32 0.0, %v2637
      %2639 = vmatmul.f32.gmra.mxu0 %v2573
      %v2640 = vpop.f32.mrf.mxu0
      %v2641 = vadd.f32 0.0, %v2640
      %2642 = vmatmul.f32.gmra.mxu0 %v2576
      %v2643 = vpop.f32.mrf.mxu0
      %v2644 = vadd.f32 0.0, %v2643
      %2645 = vmatmul.f32.gmra.mxu0 %v2579
      %v2646 = vpop.f32.mrf.mxu0
      %v2647 = vadd.f32 0.0, %v2646
      %2648 = vmatmul.f32.gmra.mxu0 %v2582
      %v2649 = vpop.f32.mrf.mxu0
      %v2650 = vadd.f32 0.0, %v2649
      %2651 = vmatmul.f32.gmra.mxu0 %v2585
      %v2652 = vpop.f32.mrf.mxu0
      %v2653 = vadd.f32 0.0, %v2652
      %2654 = vdwg.mxu0
      %v2655 = vadd.f32 %v2474, %v2608
      %v2656 = vadd.f32 %v2477, %v2611
      %v2657 = vadd.f32 %v2480, %v2614
      %v2658 = vadd.f32 %v2483, %v2617
      %v2659 = vadd.f32 %v2486, %v2620
      %v2660 = vadd.f32 %v2489, %v2623
      %v2661 = vadd.f32 %v2492, %v2626
      %v2662 = vadd.f32 %v2495, %v2629
      %v2663 = vadd.f32 %v2498, %v2632
      %v2664 = vadd.f32 %v2501, %v2635
      %v2665 = vadd.f32 %v2504, %v2638
      %v2666 = vadd.f32 %v2507, %v2641
      %v2667 = vadd.f32 %v2510, %v2644
      %v2668 = vadd.f32 %v2513, %v2647
      %v2669 = vadd.f32 %v2516, %v2650
      %v2670 = vadd.f32 %v2519, %v2653
      %v2671 = vld [vmem:[%s1839 + $0x2] sm:$0xff]
      %v2672 = vld [vmem:[%s1839 + $0xa] sm:$0xff]
      %v2673 = vld [vmem:[%s1839 + $0x1a] sm:$0xff]
      %v2674 = vld [vmem:[%s1839 + $0x22] sm:$0xff]
      %v2675 = vld [vmem:[%s1839 + $0x32] sm:$0xff]
      %v2676 = vld [vmem:[%s1839 + $0x3a] sm:$0xff]
      %v2677 = vld [vmem:[%s1839 + $0x4a] sm:$0xff]
      %v2678 = vld [vmem:[%s1839 + $0x52] sm:$0xff]
      %v2679 = vld [vmem:[%s1839 + $0x62] sm:$0xff]
      %v2680 = vld [vmem:[%s1839 + $0x6a] sm:$0xff]
      %v2681 = vld [vmem:[%s1839 + $0x7a] sm:$0xff]
      %v2682 = vld [vmem:[%s1839 + $0x82] sm:$0xff]
      %v2683 = vld [vmem:[%s1839 + $0x92] sm:$0xff]
      %v2684 = vld [vmem:[%s1839 + $0x9a] sm:$0xff]
      %v2685 = vld [vmem:[%s1839 + $0xaa] sm:$0xff]
      %v2686 = vld [vmem:[%s1839 + $0xb2] sm:$0xff]
      %s2687 = scalar_lea.vmem %s1, 60
      %v2688 = vld [vmem:[%s2687] sm:$0xf]
      %v2690 = vsel %vm235, %v2671, 0
      %v2693 = vsel %vm235, %v2672, 0
      %v2696 = vsel %vm235, %v2673, 0
      %v2699 = vsel %vm235, %v2674, 0
      %v2702 = vsel %vm235, %v2675, 0
      %v2705 = vsel %vm235, %v2676, 0
      %v2708 = vsel %vm235, %v2677, 0
      %v2711 = vsel %vm235, %v2678, 0
      %v2714 = vsel %vm235, %v2679, 0
      %v2717 = vsel %vm235, %v2680, 0
      %v2720 = vsel %vm235, %v2681, 0
      %v2723 = vsel %vm235, %v2682, 0
      %v2726 = vsel %vm235, %v2683, 0
      %v2729 = vsel %vm235, %v2684, 0
      %v2732 = vsel %vm235, %v2685, 0
      %v2735 = vsel %vm235, %v2686, 0
      %v2738 = vsel %vm284, %v2688, 0
      %2740 = vmatpush.msra.mxu0 0.0
      %2741 = vmatpush.msra.mxu0 0.0
      %2742 = vmatpush.msra.mxu0 0.0
      %2743 = vmatpush.msra.mxu0 0.0
      %2744 = vmatpush.msra.mxu0 0.0
      %2745 = vmatpush.msra.mxu0 0.0
      %2746 = vmatpush.msra.mxu0 0.0
      %2747 = vmatpush.msra.mxu0 0.0
      %2748 = vmatpush.msra.mxu0 0.0
      %2749 = vmatpush.msra.mxu0 0.0
      %2750 = vmatpush.msra.mxu0 0.0
      %2751 = vmatpush.msra.mxu0 0.0
      %2752 = vmatpush.msra.mxu0 0.0
      %2753 = vmatpush.msra.mxu0 0.0
      %2754 = vmatpush.msra.mxu0 0.0
      %2755 = vmatpush.msra.mxu0 %v2738
      %2756 = vmatmul.f32.gmra.mxu0 %v2690
      %v2757 = vpop.f32.mrf.mxu0
      %v2758 = vadd.f32 0.0, %v2757
      %2759 = vmatmul.f32.gmra.mxu0 %v2693
      %v2760 = vpop.f32.mrf.mxu0
      %v2761 = vadd.f32 0.0, %v2760
      %2762 = vmatmul.f32.gmra.mxu0 %v2696
      %v2763 = vpop.f32.mrf.mxu0
      %v2764 = vadd.f32 0.0, %v2763
      %2765 = vmatmul.f32.gmra.mxu0 %v2699
      %v2766 = vpop.f32.mrf.mxu0
      %v2767 = vadd.f32 0.0, %v2766
      %2768 = vmatmul.f32.gmra.mxu0 %v2702
      %v2769 = vpop.f32.mrf.mxu0
      %v2770 = vadd.f32 0.0, %v2769
      %2771 = vmatmul.f32.gmra.mxu0 %v2705
      %v2772 = vpop.f32.mrf.mxu0
      %v2773 = vadd.f32 0.0, %v2772
      %2774 = vmatmul.f32.gmra.mxu0 %v2708
      %v2775 = vpop.f32.mrf.mxu0
      %v2776 = vadd.f32 0.0, %v2775
      %2777 = vmatmul.f32.gmra.mxu0 %v2711
      %v2778 = vpop.f32.mrf.mxu0
      %v2779 = vadd.f32 0.0, %v2778
      %2780 = vmatmul.f32.gmra.mxu0 %v2714
      %v2781 = vpop.f32.mrf.mxu0
      %v2782 = vadd.f32 0.0, %v2781
      %2783 = vmatmul.f32.gmra.mxu0 %v2717
      %v2784 = vpop.f32.mrf.mxu0
      %v2785 = vadd.f32 0.0, %v2784
      %2786 = vmatmul.f32.gmra.mxu0 %v2720
      %v2787 = vpop.f32.mrf.mxu0
      %v2788 = vadd.f32 0.0, %v2787
      %2789 = vmatmul.f32.gmra.mxu0 %v2723
      %v2790 = vpop.f32.mrf.mxu0
      %v2791 = vadd.f32 0.0, %v2790
      %2792 = vmatmul.f32.gmra.mxu0 %v2726
      %v2793 = vpop.f32.mrf.mxu0
      %v2794 = vadd.f32 0.0, %v2793
      %2795 = vmatmul.f32.gmra.mxu0 %v2729
      %v2796 = vpop.f32.mrf.mxu0
      %v2797 = vadd.f32 0.0, %v2796
      %2798 = vmatmul.f32.gmra.mxu0 %v2732
      %v2799 = vpop.f32.mrf.mxu0
      %v2800 = vadd.f32 0.0, %v2799
      %2801 = vmatmul.f32.gmra.mxu0 %v2735
      %v2802 = vpop.f32.mrf.mxu0
      %v2803 = vadd.f32 0.0, %v2802
      %2804 = vdwg.mxu0
      %v2805 = vadd.f32 %v2655, %v2758
      %v2806 = vadd.f32 %v2656, %v2761
      %v2807 = vadd.f32 %v2657, %v2764
      %v2808 = vadd.f32 %v2658, %v2767
      %v2809 = vadd.f32 %v2659, %v2770
      %v2810 = vadd.f32 %v2660, %v2773
      %v2811 = vadd.f32 %v2661, %v2776
      %v2812 = vadd.f32 %v2662, %v2779
      %v2813 = vadd.f32 %v2663, %v2782
      %v2814 = vadd.f32 %v2664, %v2785
      %v2815 = vadd.f32 %v2665, %v2788
      %v2816 = vadd.f32 %v2666, %v2791
      %v2817 = vadd.f32 %v2667, %v2794
      %v2818 = vadd.f32 %v2668, %v2797
      %v2819 = vadd.f32 %v2669, %v2800
      %v2820 = vadd.f32 %v2670, %v2803
      %v2821 = vadd.f32 %v2805, %v773
      %v2822 = vadd.f32 %v2806, %v773
      %v2823 = vadd.f32 %v2807, %v773
      %v2824 = vadd.f32 %v2808, %v773
      %v2825 = vadd.f32 %v2809, %v773
      %v2826 = vadd.f32 %v2810, %v773
      %v2827 = vadd.f32 %v2811, %v773
      %v2828 = vadd.f32 %v2812, %v773
      %v2829 = vadd.f32 %v2813, %v773
      %v2830 = vadd.f32 %v2814, %v773
      %v2831 = vadd.f32 %v2815, %v773
      %v2832 = vadd.f32 %v2816, %v773
      %v2833 = vadd.f32 %v2817, %v773
      %v2834 = vadd.f32 %v2818, %v773
      %v2835 = vadd.f32 %v2819, %v773
      %v2836 = vadd.f32 %v2820, %v773
      %v2837 = vadd.f32 %v2821, 3.0
      %v2838 = vadd.f32 %v2822, 3.0
      %v2839 = vadd.f32 %v2823, 3.0
      %v2840 = vadd.f32 %v2824, 3.0
      %v2841 = vadd.f32 %v2825, 3.0
      %v2842 = vadd.f32 %v2826, 3.0
      %v2843 = vadd.f32 %v2827, 3.0
      %v2844 = vadd.f32 %v2828, 3.0
      %v2845 = vadd.f32 %v2829, 3.0
      %v2846 = vadd.f32 %v2830, 3.0
      %v2847 = vadd.f32 %v2831, 3.0
      %v2848 = vadd.f32 %v2832, 3.0
      %v2849 = vadd.f32 %v2833, 3.0
      %v2850 = vadd.f32 %v2834, 3.0
      %v2851 = vadd.f32 %v2835, 3.0
      %v2852 = vadd.f32 %v2836, 3.0
      %v2853 = vmax.f32 %v2837, 0.0
      %v2854 = vmax.f32 %v2838, 0.0
      %v2855 = vmax.f32 %v2839, 0.0
      %v2856 = vmax.f32 %v2840, 0.0
      %v2857 = vmax.f32 %v2841, 0.0
      %v2858 = vmax.f32 %v2842, 0.0
      %v2859 = vmax.f32 %v2843, 0.0
      %v2860 = vmax.f32 %v2844, 0.0
      %v2861 = vmax.f32 %v2845, 0.0
      %v2862 = vmax.f32 %v2846, 0.0
      %v2863 = vmax.f32 %v2847, 0.0
      %v2864 = vmax.f32 %v2848, 0.0
      %v2865 = vmax.f32 %v2849, 0.0
      %v2866 = vmax.f32 %v2850, 0.0
      %v2867 = vmax.f32 %v2851, 0.0
      %v2868 = vmax.f32 %v2852, 0.0
      %v2869 = vmin.f32 %v2853, 6.0
      %v2870 = vmin.f32 %v2854, 6.0
      %v2871 = vmin.f32 %v2855, 6.0
      %v2872 = vmin.f32 %v2856, 6.0
      %v2873 = vmin.f32 %v2857, 6.0
      %v2874 = vmin.f32 %v2858, 6.0
      %v2875 = vmin.f32 %v2859, 6.0
      %v2876 = vmin.f32 %v2860, 6.0
      %v2877 = vmin.f32 %v2861, 6.0
      %v2878 = vmin.f32 %v2862, 6.0
      %v2879 = vmin.f32 %v2863, 6.0
      %v2880 = vmin.f32 %v2864, 6.0
      %v2881 = vmin.f32 %v2865, 6.0
      %v2882 = vmin.f32 %v2866, 6.0
      %v2883 = vmin.f32 %v2867, 6.0
      %v2884 = vmin.f32 %v2868, 6.0
      %v2885 = vmul.f32 %v2821, %v2869
      %v2886 = vmul.f32 %v2822, %v2870
      %v2887 = vmul.f32 %v2823, %v2871
      %v2888 = vmul.f32 %v2824, %v2872
      %v2889 = vmul.f32 %v2825, %v2873
      %v2890 = vmul.f32 %v2826, %v2874
      %v2891 = vmul.f32 %v2827, %v2875
      %v2892 = vmul.f32 %v2828, %v2876
      %v2893 = vmul.f32 %v2829, %v2877
      %v2894 = vmul.f32 %v2830, %v2878
      %v2895 = vmul.f32 %v2831, %v2879
      %v2896 = vmul.f32 %v2832, %v2880
      %v2897 = vmul.f32 %v2833, %v2881
      %v2898 = vmul.f32 %v2834, %v2882
      %v2899 = vmul.f32 %v2835, %v2883
      %v2900 = vmul.f32 %v2836, %v2884
      %v2901 = vmul.f32 %v2885, 0.16666667
      %v2902 = vmul.f32 %v2886, 0.16666667
      %v2903 = vmul.f32 %v2887, 0.16666667
      %v2904 = vmul.f32 %v2888, 0.16666667
      %v2905 = vmul.f32 %v2889, 0.16666667
      %v2906 = vmul.f32 %v2890, 0.16666667
      %v2907 = vmul.f32 %v2891, 0.16666667
      %v2908 = vmul.f32 %v2892, 0.16666667
      %v2909 = vmul.f32 %v2893, 0.16666667
      %v2910 = vmul.f32 %v2894, 0.16666667
      %v2911 = vmul.f32 %v2895, 0.16666667
      %v2912 = vmul.f32 %v2896, 0.16666667
      %v2913 = vmul.f32 %v2897, 0.16666667
      %v2914 = vmul.f32 %v2898, 0.16666667
      %v2915 = vmul.f32 %v2899, 0.16666667
      %v2916 = vmul.f32 %v2900, 0.16666667
      %s2917 = scalar_lea.vmem %s194, 48
      %2918 = vst.msk [vmem:[%s2917] sm:$0xff] %vm871, %v2901
      %2919 = vst.msk [vmem:[%s2917 + $0x8] sm:$0xff] %vm871, %v2902
      %2920 = vst.msk [vmem:[%s2917 + $0x40] sm:$0xff] %vm871, %v2903
      %2921 = vst.msk [vmem:[%s2917 + $0x48] sm:$0xff] %vm871, %v2904
      %2922 = vst.msk [vmem:[%s2917 + $0x80] sm:$0xff] %vm871, %v2905
      %2923 = vst.msk [vmem:[%s2917 + $0x88] sm:$0xff] %vm871, %v2906
      %2924 = vst.msk [vmem:[%s2917 + $0xc0] sm:$0xff] %vm871, %v2907
      %2925 = vst.msk [vmem:[%s2917 + $0xc8] sm:$0xff] %vm871, %v2908
      %2926 = vst.msk [vmem:[%s2917 + $0x100] sm:$0xff] %vm871, %v2909
      %2927 = vst.msk [vmem:[%s2917 + $0x108] sm:$0xff] %vm871, %v2910
      %2928 = vst.msk [vmem:[%s2917 + $0x140] sm:$0xff] %vm871, %v2911
      %2929 = vst.msk [vmem:[%s2917 + $0x148] sm:$0xff] %vm871, %v2912
      %2930 = vst.msk [vmem:[%s2917 + $0x180] sm:$0xff] %vm871, %v2913
      %2931 = vst.msk [vmem:[%s2917 + $0x188] sm:$0xff] %vm871, %v2914
      %2932 = vst.msk [vmem:[%s2917 + $0x1c0] sm:$0xff] %vm871, %v2915
      %2933 = vst.msk [vmem:[%s2917 + $0x1c8] sm:$0xff] %vm871, %v2916
      %s2934 = smul.u32 8, %s19
      %p2935 = scmp.lt.s32.totalorder %s18, 1
      %s2936 = scalar_select %p2935, %s18, 1
      %p2937 = scmp.lt.s32.totalorder %s2934, 15
      %s2938 = scalar_select %p2937, %s2934, 15
      %s2939 = smul.addr %s2938, 8
      %s2940 = smul.addr %s2936, 128
      %s2941 = sadd.s32 %s2939, %s2940
      %s2942 = smul.addr %s2941, 8
      %s2943 = scalar_lea.vmem %s3, %s2942
      // Predicated region
      $region33: #{up_module_forward.1} parent=31 // pred_check
        %p2944 = pneg %p114
      $region34: #{up_module_forward.1} parent=31 // pred_check_branch
        %2946 = sbr.rel (%p2944) target = $region36
      $region35: #{up_module_forward.1} parent=31 // pred_region
        %s2947 = smul.u32 8, %s19
      $region36: #{up_module_forward.1} parent=31 // pred_fallthru
        _
    $region32: #{up_module_forward.1} parent=5 // pred_fallthru
      _
    %p2948 = scmp.le.s32.totalorder 2, %s9
    // Predicated region
    $region37: #{up_module_forward.1} parent=5 // pred_check
      %p2949 = pneg %p2948
    $region38: #{up_module_forward.1} parent=5 // pred_check_branch
      %2951 = sbr.rel (%p2949) target = $region40
    $region39: #{up_module_forward.1} parent=5 // pred_region
      %s2952 = ssub.s32 %s9, 2
      // Predicated region
      $region41: #{up_module_forward.1} parent=39 // pred_check
        %p2953 = pneg %p120
      $region42: #{up_module_forward.1} parent=39 // pred_check_branch
        %2955 = sbr.rel (%p2953) target = $region44
      $region43: #{up_module_forward.1} parent=39 // pred_region
        %s2956 = smul.u32 8, %s21
        %p2957 = scmp.lt.s32.totalorder %s20, 1
        %s2958 = scalar_select %p2957, %s20, 1
        %p2959 = scmp.lt.s32.totalorder %s2956, 15
        %s2960 = scalar_select %p2959, %s2956, 15
        %s2961 = smul.addr %s2960, 8
        %s2962 = smul.addr %s2958, 128
        %s2963 = sadd.s32 %s2961, %s2962
        %s2964 = smul.addr %s2963, 8
        %s2965 = scalar_lea.vmem %s3, %s2964
      $region44: #{up_module_forward.1} parent=39 // pred_fallthru
        _
    $region40: #{up_module_forward.1} parent=5 // pred_fallthru
      _
  $region6: #{up_module_forward.1} parent=0 // loop_footer
    %s13 = sadd.s32 1, %s9
  $region7: #{up_module_forward.1} parent=0 // loop_footer_branch
    %8 = sbr.rel target = $region3
  $region8: #{up_module_forward.1} parent=0 // loop_exit
    _

</llo_original>
